<compile_context>
chip_gen: v5e
topology: v5e:2x2
jax: 0.10.0
libtpu: 0.0.40
codegen_flags: <defaults>
</compile_context>

<pallas_src>
import functools

import jax
import jax.numpy as jnp
from jax import lax
from jax.experimental import pallas as pl
from jax.experimental.pallas import tpu as pltpu

SCALE = 2  # Upsample(scale_factor=2, size=None)


def _upsample_kernel(x_ref, o_ref, *, scale, width, fold, row_chunk):
    """x_ref: (QB, fold*width); o_ref: (QB, fold*scale*scale*width).

    Output lane layout per row is (r, di, j, k) with r < fold, di < scale,
    j < width, k < scale and  out[r, di, j, k] = in[r, j].
    """
    s = scale
    sw = s * width                        # width-repeated segment width
    qb = x_ref.shape[0]
    n_chunks = qb // row_chunk            # row_chunk always divides qb

    def emit(base):
        rows = pl.ds(base, row_chunk)
        xin = x_ref[rows, :]                              # (row_chunk, fold*width)
        for r in range(fold):
            seg = xin[:, r * width:(r + 1) * width]       # one original row strip
            wseg = jnp.repeat(seg, s, axis=-1)            # width (lane) repeat
            for di in range(s):                           # height dup: adjacent stores
                off = (r * s + di) * sw
                o_ref[rows, off:off + sw] = wseg

    if n_chunks <= 4:                                     # small blocks: unroll
        for c in range(n_chunks):
            emit(c * row_chunk)
    else:
        def body(c, carry):
            emit(pl.multiple_of(c * row_chunk, row_chunk))
            return carry
        lax.fori_loop(0, n_chunks, body, 0)


def _sublane_pack(itemsize):
    # Packed sublane multiple for the dtype (f32: 8, bf16: 16, int8/fp8: 32).
    return max(8, 32 // max(1, itemsize))


def _vmem_budget():
    """Returns (pipelined in+out double-buffer footprint budget, scoped-vmem limit)."""
    try:
        cap = int(getattr(pltpu.get_tpu_info(), "vmem_capacity_bytes", 0) or 0)
    except Exception:
        cap = 0
    if cap <= 0:
        cap = 64 << 20                     # conservative fallback (v7x per-core VMEM)
    budget = min(max(cap // 4, 8 << 20), 40 << 20)   # v6e: ~32 MiB, v7x: ~16 MiB
    limit = int(min(max(cap // 2, 32 << 20), 64 << 20))
    return budget, limit


def _choose_fold(M, H, W, itemsize, scale):
    """How many input rows to fold into the lane axis.

    Preference order: lane-dense minor dim (multiple of 128), enough total rows
    (Q >= 2 * sublane pack) for >= 2 aligned grid steps, then wider rows.
    """
    sub = _sublane_pack(itemsize)
    lane_cap = max(128, 4096 // (scale * scale))     # input lane elements per row
    best, best_key = 1, None
    for r in range(1, H + 1):
        if H % r:
            continue
        if r > 1 and r * W > lane_cap:
            continue
        q = M * (H // r)
        key = ((r * W) % 128 == 0, q >= 2 * sub, r * W)
        if best_key is None or key > best_key:
            best, best_key = r, key
    return best


def _pick_rows(Q, lanes_in, lanes_out, itemsize):
    """Rows per grid step, in-kernel row chunk, and scoped-vmem limit."""
    sub = _sublane_pack(itemsize)
    pad = lambda n: ((n + 127) // 128) * 128
    row_bytes = (pad(lanes_in) + pad(lanes_out)) * itemsize    # (8,128)-padded
    budget, limit = _vmem_budget()
    qb = max(1, budget // (2 * row_bytes))     # in+out blocks, double-buffered
    if Q >= 2 * sub:
        qb = min(qb, pl.cdiv(Q, 2))            # >= 2 grid steps (v7x: 2 TensorCores)
    qb = min(qb, Q)
    if qb >= sub:
        qb = (qb // sub) * sub                 # sublane-aligned blocks
    qb = max(1, qb)
    row_chunk = sub if qb % sub == 0 else qb   # row_chunk always divides qb
    return qb, row_chunk, limit


def upsample_nearest(x, scale_factor=SCALE):
    """Nearest-neighbour upsample of an NCHW tensor by an integer scale factor."""
    s = int(scale_factor)
    assert s >= 1 and s == scale_factor, "only integer scale_factor supported"
    N, C, H, W = x.shape
    M = N * C
    itemsize = jnp.dtype(x.dtype).itemsize

    fold = _choose_fold(M, H, W, itemsize, s)
    G = H // fold
    Q = M * G
    lanes_in = fold * W
    lanes_out = fold * s * s * W
    QB, row_chunk, vmem_limit = _pick_rows(Q, lanes_in, lanes_out, itemsize)

    x2 = x.reshape(Q, lanes_in)                 # free, contiguous view
    kernel = functools.partial(_upsample_kernel, scale=s, width=W,
                               fold=fold, row_chunk=row_chunk)
    bytes_accessed = (1 + s * s) * M * H * W * itemsize

    out2 = pl.pallas_call(
        kernel,
        out_shape=jax.ShapeDtypeStruct((Q, lanes_out), x.dtype),
        grid_spec=pltpu.PrefetchScalarGridSpec(
            num_scalar_prefetch=0,
            grid=(pl.cdiv(Q, QB),),
            in_specs=[pl.BlockSpec((QB, lanes_in), lambda q: (q, 0))],
            out_specs=pl.BlockSpec((QB, lanes_out), lambda q: (q, 0)),
        ),
        compiler_params=pltpu.CompilerParams(
            dimension_semantics=("parallel",),
            vmem_limit_bytes=vmem_limit,
        ),
        cost_estimate=pl.CostEstimate(
            flops=0, transcendentals=0, bytes_accessed=bytes_accessed),
    )(x2)

    return out2.reshape(N, C, s * H, s * W)     # free, contiguous view


if __name__ == "__main__":
    # Upsample has no learnable parameters; only the input is needed.
    key = jax.random.PRNGKey(0)
    x = jax.random.normal(key, (2, 4, 16, 16), dtype=jnp.float32)

    y = upsample_nearest(x)
    jax.block_until_ready(y)

    # Reference semantics of F.interpolate(mode='nearest', scale_factor=2):
    # out[n, c, i, j] = x[n, c, i // 2, j // 2]
    ref = jnp.repeat(jnp.repeat(x, SCALE, axis=2), SCALE, axis=3)

    assert y.shape == (2, 4, 32, 32), y.shape
    assert y.dtype == x.dtype
    assert bool(jnp.array_equal(y, ref)), "mismatch vs nearest-neighbour reference"

    print("KERNEL_OK")
</pallas_src>

<mosaic_0001>
module attributes {stable_mosaic.version = 11 : i64} {
  func.func @_upsample_kernel(%arg0: i32, %arg1: memref<8x128xf32, #tpu.memory_space<vmem>>, %arg2: memref<8x512xf32, #tpu.memory_space<vmem>>) attributes {dimension_semantics = [#tpu.dimension_semantics<parallel>], iteration_bounds = array<i64: 2>, scalar_prefetch = 0 : i64, scratch_operands = 0 : i64, tpu.core_type = #tpu.core_type<tc>, window_params = [{transform_indices = @transform_0, window_bounds = array<i64: 8, 128>}, {transform_indices = @transform_1, window_bounds = array<i64: 8, 512>}]} {
    %c0 = arith.constant 0 : index
    %c0_0 = arith.constant 0 : index
    %0 = vector.load %arg1[%c0, %c0_0] : memref<8x128xf32, #tpu.memory_space<vmem>>, vector<8x128xf32>
    %1 = vector.extract_strided_slice %0 {offsets = [0, 0], sizes = [8, 16], strides = [1, 1]} : vector<8x128xf32> to vector<8x16xf32>
    %2 = vector.shape_cast %1 : vector<8x16xf32> to vector<8x16x1xf32>
    %3 = vector.broadcast %2 : vector<8x16x1xf32> to vector<8x16x2xf32>
    %4 = vector.shape_cast %3 : vector<8x16x2xf32> to vector<8x32xf32>
    %c0_1 = arith.constant 0 : index
    %c0_2 = arith.constant 0 : index
    %5 = vector.load %arg2[%c0_1, %c0_2] : memref<8x512xf32, #tpu.memory_space<vmem>>, vector<8x32xf32>
    tpu.vector_store %arg2[%c0_1, %c0_2], %4 {strides = array<i32>} : memref<8x512xf32, #tpu.memory_space<vmem>>, vector<8x32xf32>,
    %c0_3 = arith.constant 0 : index
    %c32 = arith.constant 32 : index
    %6 = vector.load %arg2[%c0_3, %c32] : memref<8x512xf32, #tpu.memory_space<vmem>>, vector<8x32xf32>
    tpu.vector_store %arg2[%c0_3, %c32], %4 {strides = array<i32>} : memref<8x512xf32, #tpu.memory_space<vmem>>, vector<8x32xf32>,
    %7 = vector.extract_strided_slice %0 {offsets = [0, 16], sizes = [8, 16], strides = [1, 1]} : vector<8x128xf32> to vector<8x16xf32>
    %8 = vector.shape_cast %7 : vector<8x16xf32> to vector<8x16x1xf32>
    %9 = vector.broadcast %8 : vector<8x16x1xf32> to vector<8x16x2xf32>
    %10 = vector.shape_cast %9 : vector<8x16x2xf32> to vector<8x32xf32>
    %c0_4 = arith.constant 0 : index
    %c64 = arith.constant 64 : index
    %11 = vector.load %arg2[%c0_4, %c64] : memref<8x512xf32, #tpu.memory_space<vmem>>, vector<8x32xf32>
    tpu.vector_store %arg2[%c0_4, %c64], %10 {strides = array<i32>} : memref<8x512xf32, #tpu.memory_space<vmem>>, vector<8x32xf32>,
    %c0_5 = arith.constant 0 : index
    %c96 = arith.constant 96 : index
    %12 = vector.load %arg2[%c0_5, %c96] : memref<8x512xf32, #tpu.memory_space<vmem>>, vector<8x32xf32>
    tpu.vector_store %arg2[%c0_5, %c96], %10 {strides = array<i32>} : memref<8x512xf32, #tpu.memory_space<vmem>>, vector<8x32xf32>,
    %13 = vector.extract_strided_slice %0 {offsets = [0, 32], sizes = [8, 16], strides = [1, 1]} : vector<8x128xf32> to vector<8x16xf32>
    %14 = vector.shape_cast %13 : vector<8x16xf32> to vector<8x16x1xf32>
    %15 = vector.broadcast %14 : vector<8x16x1xf32> to vector<8x16x2xf32>
    %16 = vector.shape_cast %15 : vector<8x16x2xf32> to vector<8x32xf32>
    %c0_6 = arith.constant 0 : index
    %c128 = arith.constant 128 : index
    %17 = vector.load %arg2[%c0_6, %c128] : memref<8x512xf32, #tpu.memory_space<vmem>>, vector<8x32xf32>
    tpu.vector_store %arg2[%c0_6, %c128], %16 {strides = array<i32>} : memref<8x512xf32, #tpu.memory_space<vmem>>, vector<8x32xf32>,
    %c0_7 = arith.constant 0 : index
    %c160 = arith.constant 160 : index
    %18 = vector.load %arg2[%c0_7, %c160] : memref<8x512xf32, #tpu.memory_space<vmem>>, vector<8x32xf32>
    tpu.vector_store %arg2[%c0_7, %c160], %16 {strides = array<i32>} : memref<8x512xf32, #tpu.memory_space<vmem>>, vector<8x32xf32>,
    %19 = vector.extract_strided_slice %0 {offsets = [0, 48], sizes = [8, 16], strides = [1, 1]} : vector<8x128xf32> to vector<8x16xf32>
    %20 = vector.shape_cast %19 : vector<8x16xf32> to vector<8x16x1xf32>
    %21 = vector.broadcast %20 : vector<8x16x1xf32> to vector<8x16x2xf32>
    %22 = vector.shape_cast %21 : vector<8x16x2xf32> to vector<8x32xf32>
    %c0_8 = arith.constant 0 : index
    %c192 = arith.constant 192 : index
    %23 = vector.load %arg2[%c0_8, %c192] : memref<8x512xf32, #tpu.memory_space<vmem>>, vector<8x32xf32>
    tpu.vector_store %arg2[%c0_8, %c192], %22 {strides = array<i32>} : memref<8x512xf32, #tpu.memory_space<vmem>>, vector<8x32xf32>,
    %c0_9 = arith.constant 0 : index
    %c224 = arith.constant 224 : index
    %24 = vector.load %arg2[%c0_9, %c224] : memref<8x512xf32, #tpu.memory_space<vmem>>, vector<8x32xf32>
    tpu.vector_store %arg2[%c0_9, %c224], %22 {strides = array<i32>} : memref<8x512xf32, #tpu.memory_space<vmem>>, vector<8x32xf32>,
    %25 = vector.extract_strided_slice %0 {offsets = [0, 64], sizes = [8, 16], strides = [1, 1]} : vector<8x128xf32> to vector<8x16xf32>
    %26 = vector.shape_cast %25 : vector<8x16xf32> to vector<8x16x1xf32>
    %27 = vector.broadcast %26 : vector<8x16x1xf32> to vector<8x16x2xf32>
    %28 = vector.shape_cast %27 : vector<8x16x2xf32> to vector<8x32xf32>
    %c0_10 = arith.constant 0 : index
    %c256 = arith.constant 256 : index
    %29 = vector.load %arg2[%c0_10, %c256] : memref<8x512xf32, #tpu.memory_space<vmem>>, vector<8x32xf32>
    tpu.vector_store %arg2[%c0_10, %c256], %28 {strides = array<i32>} : memref<8x512xf32, #tpu.memory_space<vmem>>, vector<8x32xf32>,
    %c0_11 = arith.constant 0 : index
    %c288 = arith.constant 288 : index
    %30 = vector.load %arg2[%c0_11, %c288] : memref<8x512xf32, #tpu.memory_space<vmem>>, vector<8x32xf32>
    tpu.vector_store %arg2[%c0_11, %c288], %28 {strides = array<i32>} : memref<8x512xf32, #tpu.memory_space<vmem>>, vector<8x32xf32>,
    %31 = vector.extract_strided_slice %0 {offsets = [0, 80], sizes = [8, 16], strides = [1, 1]} : vector<8x128xf32> to vector<8x16xf32>
    %32 = vector.shape_cast %31 : vector<8x16xf32> to vector<8x16x1xf32>
    %33 = vector.broadcast %32 : vector<8x16x1xf32> to vector<8x16x2xf32>
    %34 = vector.shape_cast %33 : vector<8x16x2xf32> to vector<8x32xf32>
    %c0_12 = arith.constant 0 : index
    %c320 = arith.constant 320 : index
    %35 = vector.load %arg2[%c0_12, %c320] : memref<8x512xf32, #tpu.memory_space<vmem>>, vector<8x32xf32>
    tpu.vector_store %arg2[%c0_12, %c320], %34 {strides = array<i32>} : memref<8x512xf32, #tpu.memory_space<vmem>>, vector<8x32xf32>,
    %c0_13 = arith.constant 0 : index
    %c352 = arith.constant 352 : index
    %36 = vector.load %arg2[%c0_13, %c352] : memref<8x512xf32, #tpu.memory_space<vmem>>, vector<8x32xf32>
    tpu.vector_store %arg2[%c0_13, %c352], %34 {strides = array<i32>} : memref<8x512xf32, #tpu.memory_space<vmem>>, vector<8x32xf32>,
    %37 = vector.extract_strided_slice %0 {offsets = [0, 96], sizes = [8, 16], strides = [1, 1]} : vector<8x128xf32> to vector<8x16xf32>
    %38 = vector.shape_cast %37 : vector<8x16xf32> to vector<8x16x1xf32>
    %39 = vector.broadcast %38 : vector<8x16x1xf32> to vector<8x16x2xf32>
    %40 = vector.shape_cast %39 : vector<8x16x2xf32> to vector<8x32xf32>
    %c0_14 = arith.constant 0 : index
    %c384 = arith.constant 384 : index
    %41 = vector.load %arg2[%c0_14, %c384] : memref<8x512xf32, #tpu.memory_space<vmem>>, vector<8x32xf32>
    tpu.vector_store %arg2[%c0_14, %c384], %40 {strides = array<i32>} : memref<8x512xf32, #tpu.memory_space<vmem>>, vector<8x32xf32>,
    %c0_15 = arith.constant 0 : index
    %c416 = arith.constant 416 : index
    %42 = vector.load %arg2[%c0_15, %c416] : memref<8x512xf32, #tpu.memory_space<vmem>>, vector<8x32xf32>
    tpu.vector_store %arg2[%c0_15, %c416], %40 {strides = array<i32>} : memref<8x512xf32, #tpu.memory_space<vmem>>, vector<8x32xf32>,
    %43 = vector.extract_strided_slice %0 {offsets = [0, 112], sizes = [8, 16], strides = [1, 1]} : vector<8x128xf32> to vector<8x16xf32>
    %44 = vector.shape_cast %43 : vector<8x16xf32> to vector<8x16x1xf32>
    %45 = vector.broadcast %44 : vector<8x16x1xf32> to vector<8x16x2xf32>
    %46 = vector.shape_cast %45 : vector<8x16x2xf32> to vector<8x32xf32>
    %c0_16 = arith.constant 0 : index
    %c448 = arith.constant 448 : index
    %47 = vector.load %arg2[%c0_16, %c448] : memref<8x512xf32, #tpu.memory_space<vmem>>, vector<8x32xf32>
    tpu.vector_store %arg2[%c0_16, %c448], %46 {strides = array<i32>} : memref<8x512xf32, #tpu.memory_space<vmem>>, vector<8x32xf32>,
    %c0_17 = arith.constant 0 : index
    %c480 = arith.constant 480 : index
    %48 = vector.load %arg2[%c0_17, %c480] : memref<8x512xf32, #tpu.memory_space<vmem>>, vector<8x32xf32>
    tpu.vector_store %arg2[%c0_17, %c480], %46 {strides = array<i32>} : memref<8x512xf32, #tpu.memory_space<vmem>>, vector<8x32xf32>,
    return
  }
  func.func @transform_0(%arg0: i32) -> (i32, i32) {
    %c0_i32 = arith.constant 0 : i32
    %c0_i32_0 = arith.constant 0 : i32
    return %arg0, %c0_i32 : i32, i32
  }
  func.func @transform_1(%arg0: i32) -> (i32, i32) {
    %c0_i32 = arith.constant 0 : i32
    %c0_i32_0 = arith.constant 0 : i32
    return %arg0, %c0_i32 : i32, i32
  }
}

</mosaic_0001>

<llo_original>
// kernel: tpu_custom_call.1
$region0: #{tpu_custom_call.1}
  #allocation0 [shape = 'u32[]', space=smem, size = 0x4, offset = 0x4, fixed_abs, tag = 'smem constant byte address 0x4 - core index']
  #allocation1 [shape = 'u32[72,128]{1,0:T(1,128)}', space=vmem, size = 0x9000, scoped, tag = 'internal scratch']
  %s0 = inlined_call_operand.hbm [shape: f32[16,128], index: 0, kind: input, shape index: {}]
  %s1 = inlined_call_operand.hbm [shape: f32[16,512], index: 1, kind: output, shape index: {}]
  %s2 = sld [smem:[#allocation0]]
  $region41: #{tpu_custom_call.1} parent=0
    _
  %s4 = ssub.s32 1, %s2
  %s5 = scalar_select 0, %s4, %s2
  $region1: #{tpu_custom_call.1} parent=0
    #allocation2 [shape = 'u8[8192]{0}', space=vmem, size = 0x2000, scoped, tag = 'input window, operand 0']
    #allocation3 [shape = 's32[2]{0}', space=sflag, size = 0x8, scoped, tag = 'scoped memory for tpu_custom_call.1']
    #allocation4 [shape = 's32[2]{0}', space=sflag, size = 0x8, scoped, tag = 'scoped memory for tpu_custom_call.1']
    #allocation5 [shape = 'u8[32768]{0}', space=vmem, size = 0x8000, scoped, tag = 'output window, operand 0']
    %6 = vsyncpa [#allocation3], 0
    %s7 = scalar_lea.sflag [#allocation3], 1
    %8 = vsyncpa %s7, 0
    %9 = vsyncpa [#allocation4], 0
    %s10 = scalar_lea.sflag [#allocation4], 1
    %11 = vsyncpa %s10, 0
    loop: start=0, step=1, limit=4
    $region2: #{tpu_custom_call.1} parent=1 // loop_pre_header
      _
    $region3: #{tpu_custom_call.1} parent=1 // loop_header
      %s13 = sphi 0, %s17
      %p14 = scmp.ge.s32.totalorder %s13, 4
      %s23 = sphi 0, %s25
      %s26 = sphi 0, %s23
      %s27 = sphi 0, %s26
      %s43 = sphi 0, %s27
      %s49 = sphi 0, %s51
      %s52 = sphi 0, %s49
      %s53 = sphi 0, %s52
      %s69 = sphi 0, %s53
    $region4: #{tpu_custom_call.1} parent=1 // loop_header_branch
      %16 = sbr.rel (%p14) target = $region8
    $region5: #{tpu_custom_call.1} parent=1 // loop_body
      %s18 = ssub.s32 %s13, 1
      %s19 = ssub.s32 %s13, 2
      %s20 = sadd.s32 %s13, 1
      %s21 = ssub.s32 %s13, %s20
      %p22 = scmp.eq.s32.totalorder %s21, 0
      %s24 = sadd.s32 %s23, 1
      %s25 = scalar_select %p22, %s23, %s24
      %p28 = pneg %p22
      %p29 = scmp.eq.s32.totalorder %s13, 1
      %p30 = por %p28, %p29
      %p31 = scmp.ne.s32.totalorder %s23, %s26
      %p32 = scmp.eq.s32.totalorder %s13, 0
      %p33 = por %p31, %p32
      %p34 = scmp.ne.s32.totalorder %s23, %s26
      %p35 = scmp.eq.s32.totalorder %s18, 1
      %p36 = por %p34, %p35
      %p37 = scmp.ne.s32.totalorder %s26, %s27
      %p38 = scmp.eq.s32.totalorder %s18, 0
      %p39 = por %p37, %p38
      %p40 = scmp.ne.s32.totalorder %s26, %s27
      %p41 = scmp.eq.s32.totalorder %s19, 1
      %p42 = por %p40, %p41
      %p44 = scmp.ne.s32.totalorder %s27, %s43
      %p45 = scmp.eq.s32.totalorder %s19, 0
      %p46 = por %p44, %p45
      %s47 = ssub.s32 %s13, %s20
      %p48 = scmp.eq.s32.totalorder %s47, 0
      %s50 = sadd.s32 %s49, 1
      %s51 = scalar_select %p48, %s49, %s50
      %p54 = pneg %p48
      %p55 = scmp.eq.s32.totalorder %s13, 1
      %p56 = por %p54, %p55
      %p57 = scmp.ne.s32.totalorder %s49, %s52
      %p58 = scmp.eq.s32.totalorder %s13, 0
      %p59 = por %p57, %p58
      %p60 = scmp.ne.s32.totalorder %s49, %s52
      %p61 = scmp.eq.s32.totalorder %s18, 1
      %p62 = por %p60, %p61
      %p63 = scmp.ne.s32.totalorder %s52, %s53
      %p64 = scmp.eq.s32.totalorder %s18, 0
      %p65 = por %p63, %p64
      %p66 = scmp.ne.s32.totalorder %s52, %s53
      %p67 = scmp.eq.s32.totalorder %s19, 1
      %p68 = por %p66, %p67
      %p70 = scmp.ne.s32.totalorder %s53, %s69
      %p71 = scmp.eq.s32.totalorder %s19, 0
      %p72 = por %p70, %p71
      %p73 = scmp.le.s32.totalorder 1, %s13
      %p74 = scmp.lt.s32.totalorder %s13, 3
      %p75 = pnand %p73, %p74
      %p76 = pneg %p75
      // Predicated region
      $region9: #{tpu_custom_call.1} parent=5 // pred_check
        _
      $region10: #{tpu_custom_call.1} parent=5 // pred_check_branch
        %78 = sbr.rel (%p75) target = $region12
      $region11: #{tpu_custom_call.1} parent=5 // pred_region
        %s79 = ssub.s32 %s13, 1
      $region12: #{tpu_custom_call.1} parent=5 // pred_fallthru
        _
      %p80 = scmp.lt.s32.totalorder %s13, 2
      // Predicated region
      $region13: #{tpu_custom_call.1} parent=5 // pred_check
        %p81 = pneg %p80
      $region14: #{tpu_custom_call.1} parent=5 // pred_check_branch
        %83 = sbr.rel (%p81) target = $region16
      $region15: #{tpu_custom_call.1} parent=5 // pred_region
        // Predicated region
        $region17: #{tpu_custom_call.1} parent=15 // pred_check
          %p84 = pneg %p33
        $region18: #{tpu_custom_call.1} parent=15 // pred_check_branch
          %86 = sbr.rel (%p84) target = $region20
        $region19: #{tpu_custom_call.1} parent=15 // pred_region
          %s87 = sand.u32 %s23, 1
          %s88 = scalar_lea.sflag [#allocation3], %s87
          %s89 = sand.u32 %s23, 1
          %s90 = smul.addr %s89, 8
          %s91 = scalar_lea.vmem [#allocation2], %s90
          %93 = vsyncadd %s88, 0
          %s94 = smul.addr %s13, 8
          %s95 = scalar_lea.hbm %s0, %s94
          %s97 = sshll.u32 %s95, 4
          %s98 = int_to_ptr.hbm [resolvable:$true] %s97
          %s99 = sshll.u32 %s91, 4
          %s100 = int_to_ptr.vmem [resolvable:$true] %s99
          %102 = dma.hbm_to_vmem [thread:$0]  %s98, 128, %s100, %s88
        $region20: #{tpu_custom_call.1} parent=15 // pred_fallthru
          _
      $region16: #{tpu_custom_call.1} parent=5 // pred_fallthru
        _
      %p103 = scmp.le.s32.totalorder 1, %s13
      %p104 = scmp.lt.s32.totalorder %s13, 3
      %p105 = pnand %p103, %p104
      %p106 = pneg %p105
      // Predicated region
      $region21: #{tpu_custom_call.1} parent=5 // pred_check
        _
      $region22: #{tpu_custom_call.1} parent=5 // pred_check_branch
        %108 = sbr.rel (%p105) target = $region24
      $region23: #{tpu_custom_call.1} parent=5 // pred_region
        %s109 = ssub.s32 %s13, 1
        %s110 = sand.u32 %s26, 1
        %s111 = scalar_lea.sflag [#allocation3], %s110
        %s112 = sand.u32 %s26, 1
        %s113 = smul.addr %s112, 8
        %s114 = scalar_lea.vmem [#allocation2], %s113
        // Predicated region
        $region25: #{tpu_custom_call.1} parent=23 // pred_check
          %p115 = pneg %p39
        $region26: #{tpu_custom_call.1} parent=23 // pred_check_branch
          %117 = sbr.rel (%p115) target = $region28
        $region27: #{tpu_custom_call.1} parent=23 // pred_region
          %119 = dma.done %s111, 128
        $region28: #{tpu_custom_call.1} parent=23 // pred_fallthru
          _
        %s120 = sand.u32 %s26, 1
        %s121 = scalar_lea.sflag [#allocation3], %s120
        %s122 = sand.u32 %s26, 1
        %s123 = smul.addr %s122, 8
        %s124 = scalar_lea.vmem [#allocation2], %s123
        %p125 = pneg %p39
        %p126 = pneg %p36
        %p127 = pneg %p65
        %p128 = pneg %p62
        %s129 = sand.u32 %s52, 1
        %s130 = scalar_lea.sflag [#allocation4], %s129
        %s131 = sand.u32 %s52, 1
        %s132 = smul.addr %s131, 32
        %s133 = scalar_lea.vmem [#allocation5], %s132
        %v134 = vld [vmem:[%s114] sm:$0xff]
        %v135 = vperm.slane %v134, 0
        %v136 = vlaneseq
        %v137 = vshrl.u32 %v136, 7
        %139 = vset.pattern.permute.xlu0 %v137
        %140 = vperm.xlu0 %139, %v135
        %v141 = vpop.permute.xlu0 %140
        %v142 = vlaneseq
        %v143 = vshrl.u32 %v142, 7
        %v144 = vadd.s32 %v143, 8
        %145 = vset.pattern.permute.xlu0 %v144
        %146 = vperm.xlu0 %145, %v135
        %v147 = vpop.permute.xlu0 %146
        %v148 = vperm.slane %v134, 1
        %v149 = vlaneseq
        %v150 = vshrl.u32 %v149, 7
        %152 = vset.pattern.permute.xlu0 %v150
        %153 = vperm.xlu0 %152, %v148
        %v154 = vpop.permute.xlu0 %153
        %v155 = vlaneseq
        %v156 = vshrl.u32 %v155, 7
        %v157 = vadd.s32 %v156, 8
        %158 = vset.pattern.permute.xlu0 %v157
        %159 = vperm.xlu0 %158, %v148
        %v160 = vpop.permute.xlu0 %159
        %v161 = vperm.slane %v134, 2
        %v162 = vlaneseq
        %v163 = vshrl.u32 %v162, 7
        %165 = vset.pattern.permute.xlu0 %v163
        %166 = vperm.xlu0 %165, %v161
        %v167 = vpop.permute.xlu0 %166
        %v168 = vlaneseq
        %v169 = vshrl.u32 %v168, 7
        %v170 = vadd.s32 %v169, 8
        %171 = vset.pattern.permute.xlu0 %v170
        %172 = vperm.xlu0 %171, %v161
        %v173 = vpop.permute.xlu0 %172
        %v174 = vperm.slane %v134, 3
        %v175 = vlaneseq
        %v176 = vshrl.u32 %v175, 7
        %178 = vset.pattern.permute.xlu0 %v176
        %179 = vperm.xlu0 %178, %v174
        %v180 = vpop.permute.xlu0 %179
        %v181 = vlaneseq
        %v182 = vshrl.u32 %v181, 7
        %v183 = vadd.s32 %v182, 8
        %184 = vset.pattern.permute.xlu0 %v183
        %185 = vperm.xlu0 %184, %v174
        %v186 = vpop.permute.xlu0 %185
        %v187 = vperm.slane %v134, 4
        %v188 = vlaneseq
        %v189 = vshrl.u32 %v188, 7
        %191 = vset.pattern.permute.xlu0 %v189
        %192 = vperm.xlu0 %191, %v187
        %v193 = vpop.permute.xlu0 %192
        %v194 = vlaneseq
        %v195 = vshrl.u32 %v194, 7
        %v196 = vadd.s32 %v195, 8
        %197 = vset.pattern.permute.xlu0 %v196
        %198 = vperm.xlu0 %197, %v187
        %v199 = vpop.permute.xlu0 %198
        %v200 = vperm.slane %v134, 5
        %v201 = vlaneseq
        %v202 = vshrl.u32 %v201, 7
        %204 = vset.pattern.permute.xlu0 %v202
        %205 = vperm.xlu0 %204, %v200
        %v206 = vpop.permute.xlu0 %205
        %v207 = vlaneseq
        %v208 = vshrl.u32 %v207, 7
        %v209 = vadd.s32 %v208, 8
        %210 = vset.pattern.permute.xlu0 %v209
        %211 = vperm.xlu0 %210, %v200
        %v212 = vpop.permute.xlu0 %211
        %v213 = vperm.slane %v134, 6
        %v214 = vlaneseq
        %v215 = vshrl.u32 %v214, 7
        %217 = vset.pattern.permute.xlu0 %v215
        %218 = vperm.xlu0 %217, %v213
        %v219 = vpop.permute.xlu0 %218
        %v220 = vlaneseq
        %v221 = vshrl.u32 %v220, 7
        %v222 = vadd.s32 %v221, 8
        %223 = vset.pattern.permute.xlu0 %v222
        %224 = vperm.xlu0 %223, %v213
        %v225 = vpop.permute.xlu0 %224
        %v226 = vperm.slane %v134, 7
        %v227 = vlaneseq
        %v228 = vshrl.u32 %v227, 7
        %230 = vset.pattern.permute.xlu0 %v228
        %231 = vperm.xlu0 %230, %v226
        %v232 = vpop.permute.xlu0 %231
        %v233 = vlaneseq
        %v234 = vshrl.u32 %v233, 7
        %v235 = vadd.s32 %v234, 8
        %236 = vset.pattern.permute.xlu0 %v235
        %237 = vperm.xlu0 %236, %v226
        %v238 = vpop.permute.xlu0 %237
        %v239 = vrot.slane %v167, 4
        %vm240 = vcmask 1047556
        %v241 = vsel %vm240, %v239, %v141
        %v242 = vrot.slane %v141, 4
        %v243 = vsel %vm240, %v167, %v242
        %v245 = vunpack.c.l.s4 1983009808
        %v246 = vunpack.c.0.s8 %v245
        %v247 = vperm.slane %v241, %v246
        %v249 = vunpack.c.l.s4 1983009808
        %v250 = vunpack.c.0.s8 %v249
        %v251 = vperm.slane %v243, %v250
        %v252 = vrot.slane %v180, 4
        %v253 = vsel %vm240, %v252, %v154
        %v254 = vrot.slane %v154, 4
        %v255 = vsel %vm240, %v180, %v254
        %v257 = vunpack.c.l.s4 1983009808
        %v258 = vunpack.c.0.s8 %v257
        %v259 = vperm.slane %v253, %v258
        %v261 = vunpack.c.l.s4 1983009808
        %v262 = vunpack.c.0.s8 %v261
        %v263 = vperm.slane %v255, %v262
        %v264 = vrot.slane %v219, 4
        %v265 = vsel %vm240, %v264, %v193
        %v266 = vrot.slane %v193, 4
        %v267 = vsel %vm240, %v219, %v266
        %v269 = vunpack.c.l.s4 1983009808
        %v270 = vunpack.c.0.s8 %v269
        %v271 = vperm.slane %v265, %v270
        %v273 = vunpack.c.l.s4 1983009808
        %v274 = vunpack.c.0.s8 %v273
        %v275 = vperm.slane %v267, %v274
        %v276 = vrot.slane %v232, 4
        %v277 = vsel %vm240, %v276, %v206
        %v278 = vrot.slane %v206, 4
        %v279 = vsel %vm240, %v232, %v278
        %v281 = vunpack.c.l.s4 1983009808
        %v282 = vunpack.c.0.s8 %v281
        %v283 = vperm.slane %v277, %v282
        %v285 = vunpack.c.l.s4 1983009808
        %v286 = vunpack.c.0.s8 %v285
        %v287 = vperm.slane %v279, %v286
        %v288 = vrot.slane %v259, 4
        %v289 = vsel %vm240, %v288, %v247
        %v290 = vrot.slane %v247, 4
        %v291 = vsel %vm240, %v259, %v290
        %v293 = vunpack.c.l.s4 1934713408
        %v294 = vunpack.c.0.s8 %v293
        %v295 = vperm.slane %v289, %v294
        %v297 = vunpack.c.l.s4 1934713408
        %v298 = vunpack.c.0.s8 %v297
        %v299 = vperm.slane %v291, %v298
        %v300 = vrot.slane %v263, 4
        %v301 = vsel %vm240, %v300, %v251
        %v302 = vrot.slane %v251, 4
        %v303 = vsel %vm240, %v263, %v302
        %v305 = vunpack.c.l.s4 1934713408
        %v306 = vunpack.c.0.s8 %v305
        %v307 = vperm.slane %v301, %v306
        %v309 = vunpack.c.l.s4 1934713408
        %v310 = vunpack.c.0.s8 %v309
        %v311 = vperm.slane %v303, %v310
        %v312 = vrot.slane %v283, 4
        %v313 = vsel %vm240, %v312, %v271
        %v314 = vrot.slane %v271, 4
        %v315 = vsel %vm240, %v283, %v314
        %v317 = vunpack.c.l.s4 1934713408
        %v318 = vunpack.c.0.s8 %v317
        %v319 = vperm.slane %v313, %v318
        %v321 = vunpack.c.l.s4 1934713408
        %v322 = vunpack.c.0.s8 %v321
        %v323 = vperm.slane %v315, %v322
        %v324 = vrot.slane %v287, 4
        %v325 = vsel %vm240, %v324, %v275
        %v326 = vrot.slane %v275, 4
        %v327 = vsel %vm240, %v287, %v326
        %v329 = vunpack.c.l.s4 1934713408
        %v330 = vunpack.c.0.s8 %v329
        %v331 = vperm.slane %v325, %v330
        %v333 = vunpack.c.l.s4 1934713408
        %v334 = vunpack.c.0.s8 %v333
        %v335 = vperm.slane %v327, %v334
        %v336 = vrot.slane %v319, 4
        %v337 = vsel %vm240, %v336, %v295
        %v338 = vrot.slane %v295, 4
        %v339 = vsel %vm240, %v319, %v338
        %v340 = vrot.slane %v323, 4
        %v341 = vsel %vm240, %v340, %v299
        %v342 = vrot.slane %v299, 4
        %v343 = vsel %vm240, %v323, %v342
        %v344 = vrot.slane %v331, 4
        %v345 = vsel %vm240, %v344, %v307
        %v346 = vrot.slane %v307, 4
        %v347 = vsel %vm240, %v331, %v346
        %v348 = vrot.slane %v335, 4
        %v349 = vsel %vm240, %v348, %v311
        %v350 = vrot.slane %v311, 4
        %v351 = vsel %vm240, %v335, %v350
        %v352 = vrot.slane %v173, 4
        %v353 = vsel %vm240, %v352, %v147
        %v354 = vrot.slane %v147, 4
        %v355 = vsel %vm240, %v173, %v354
        %v357 = vunpack.c.l.s4 1983009808
        %v358 = vunpack.c.0.s8 %v357
        %v359 = vperm.slane %v353, %v358
        %v361 = vunpack.c.l.s4 1983009808
        %v362 = vunpack.c.0.s8 %v361
        %v363 = vperm.slane %v355, %v362
        %v364 = vrot.slane %v186, 4
        %v365 = vsel %vm240, %v364, %v160
        %v366 = vrot.slane %v160, 4
        %v367 = vsel %vm240, %v186, %v366
        %v369 = vunpack.c.l.s4 1983009808
        %v370 = vunpack.c.0.s8 %v369
        %v371 = vperm.slane %v365, %v370
        %v373 = vunpack.c.l.s4 1983009808
        %v374 = vunpack.c.0.s8 %v373
        %v375 = vperm.slane %v367, %v374
        %v376 = vrot.slane %v225, 4
        %v377 = vsel %vm240, %v376, %v199
        %v378 = vrot.slane %v199, 4
        %v379 = vsel %vm240, %v225, %v378
        %v381 = vunpack.c.l.s4 1983009808
        %v382 = vunpack.c.0.s8 %v381
        %v383 = vperm.slane %v377, %v382
        %v385 = vunpack.c.l.s4 1983009808
        %v386 = vunpack.c.0.s8 %v385
        %v387 = vperm.slane %v379, %v386
        %v388 = vrot.slane %v238, 4
        %v389 = vsel %vm240, %v388, %v212
        %v390 = vrot.slane %v212, 4
        %v391 = vsel %vm240, %v238, %v390
        %v393 = vunpack.c.l.s4 1983009808
        %v394 = vunpack.c.0.s8 %v393
        %v395 = vperm.slane %v389, %v394
        %v397 = vunpack.c.l.s4 1983009808
        %v398 = vunpack.c.0.s8 %v397
        %v399 = vperm.slane %v391, %v398
        %v400 = vrot.slane %v371, 4
        %v401 = vsel %vm240, %v400, %v359
        %v402 = vrot.slane %v359, 4
        %v403 = vsel %vm240, %v371, %v402
        %v405 = vunpack.c.l.s4 1934713408
        %v406 = vunpack.c.0.s8 %v405
        %v407 = vperm.slane %v401, %v406
        %v409 = vunpack.c.l.s4 1934713408
        %v410 = vunpack.c.0.s8 %v409
        %v411 = vperm.slane %v403, %v410
        %v412 = vrot.slane %v375, 4
        %v413 = vsel %vm240, %v412, %v363
        %v414 = vrot.slane %v363, 4
        %v415 = vsel %vm240, %v375, %v414
        %v417 = vunpack.c.l.s4 1934713408
        %v418 = vunpack.c.0.s8 %v417
        %v419 = vperm.slane %v413, %v418
        %v421 = vunpack.c.l.s4 1934713408
        %v422 = vunpack.c.0.s8 %v421
        %v423 = vperm.slane %v415, %v422
        %v424 = vrot.slane %v395, 4
        %v425 = vsel %vm240, %v424, %v383
        %v426 = vrot.slane %v383, 4
        %v427 = vsel %vm240, %v395, %v426
        %v429 = vunpack.c.l.s4 1934713408
        %v430 = vunpack.c.0.s8 %v429
        %v431 = vperm.slane %v425, %v430
        %v433 = vunpack.c.l.s4 1934713408
        %v434 = vunpack.c.0.s8 %v433
        %v435 = vperm.slane %v427, %v434
        %v436 = vrot.slane %v399, 4
        %v437 = vsel %vm240, %v436, %v387
        %v438 = vrot.slane %v387, 4
        %v439 = vsel %vm240, %v399, %v438
        %v441 = vunpack.c.l.s4 1934713408
        %v442 = vunpack.c.0.s8 %v441
        %v443 = vperm.slane %v437, %v442
        %v445 = vunpack.c.l.s4 1934713408
        %v446 = vunpack.c.0.s8 %v445
        %v447 = vperm.slane %v439, %v446
        %v448 = vrot.slane %v431, 4
        %v449 = vsel %vm240, %v448, %v407
        %v450 = vrot.slane %v407, 4
        %v451 = vsel %vm240, %v431, %v450
        %v452 = vrot.slane %v435, 4
        %v453 = vsel %vm240, %v452, %v411
        %v454 = vrot.slane %v411, 4
        %v455 = vsel %vm240, %v435, %v454
        %v456 = vrot.slane %v443, 4
        %v457 = vsel %vm240, %v456, %v419
        %v458 = vrot.slane %v419, 4
        %v459 = vsel %vm240, %v443, %v458
        %v460 = vrot.slane %v447, 4
        %v461 = vsel %vm240, %v460, %v423
        %v462 = vrot.slane %v423, 4
        %v463 = vsel %vm240, %v447, %v462
        %465 = vrot.lane.b32.xlu0 %v339, 2
        %v466 = vpop.permute.xlu0 %465
        %469 = vrot.lane.b32.xlu0 %v341, 4
        %v470 = vpop.permute.xlu0 %469
        %473 = vrot.lane.b32.xlu0 %v343, 6
        %v474 = vpop.permute.xlu0 %473
        %477 = vrot.lane.b32.xlu0 %v345, 8
        %v478 = vpop.permute.xlu0 %477
        %481 = vrot.lane.b32.xlu0 %v347, 10
        %v482 = vpop.permute.xlu0 %481
        %485 = vrot.lane.b32.xlu0 %v349, 12
        %v486 = vpop.permute.xlu0 %485
        %489 = vrot.lane.b32.xlu0 %v351, 14
        %v490 = vpop.permute.xlu0 %489
        %493 = vrot.lane.b32.xlu0 %v449, 16
        %v494 = vpop.permute.xlu0 %493
        %497 = vrot.lane.b32.xlu0 %v451, 18
        %v498 = vpop.permute.xlu0 %497
        %501 = vrot.lane.b32.xlu0 %v453, 20
        %v502 = vpop.permute.xlu0 %501
        %505 = vrot.lane.b32.xlu0 %v455, 22
        %v506 = vpop.permute.xlu0 %505
        %509 = vrot.lane.b32.xlu0 %v457, 24
        %v510 = vpop.permute.xlu0 %509
        %513 = vrot.lane.b32.xlu0 %v459, 26
        %v514 = vpop.permute.xlu0 %513
        %517 = vrot.lane.b32.xlu0 %v461, 28
        %v518 = vpop.permute.xlu0 %517
        %521 = vrot.lane.b32.xlu0 %v463, 30
        %v522 = vpop.permute.xlu0 %521
        %vm524 = vcmask 15360
        %v525 = vsel %vm524, %v337, %v466
        %vm526 = vcmask 31744
        %v527 = vsel %vm526, %v525, %v470
        %vm528 = vcmask 48128
        %v529 = vsel %vm528, %v527, %v474
        %vm530 = vcmask 64512
        %v531 = vsel %vm530, %v529, %v478
        %vm532 = vcmask 80896
        %v533 = vsel %vm532, %v531, %v482
        %vm534 = vcmask 97280
        %v535 = vsel %vm534, %v533, %v486
        %vm536 = vcmask 113664
        %v537 = vsel %vm536, %v535, %v490
        %vm538 = vcmask 130048
        %v539 = vsel %vm538, %v537, %v494
        %vm540 = vcmask 146432
        %v541 = vsel %vm540, %v539, %v498
        %vm542 = vcmask 162816
        %v543 = vsel %vm542, %v541, %v502
        %vm544 = vcmask 179200
        %v545 = vsel %vm544, %v543, %v506
        %vm546 = vcmask 195584
        %v547 = vsel %vm546, %v545, %v510
        %vm548 = vcmask 211968
        %v549 = vsel %vm548, %v547, %v514
        %vm550 = vcmask 228352
        %v551 = vsel %vm550, %v549, %v518
        %vm552 = vcmask 244736
        %v553 = vsel %vm552, %v551, %v522
        %vm554 = vcmask 261120
        %555 = vst.msk [vmem:[%s133] sm:$0xff] %vm554, %v553
        %557 = vrot.lane.b32.xlu0 %v553, 32
        %v558 = vpop.permute.xlu0 %557
        %vm560 = vcmask 523520
        %561 = vst.msk [vmem:[%s133] sm:$0xff] %vm560, %v558
        %v562 = vlaneseq
        %v563 = vshrl.u32 %v562, 7
        %v564 = vadd.s32 %v563, 16
        %565 = vset.pattern.permute.xlu0 %v564
        %566 = vperm.xlu0 %565, %v135
        %v567 = vpop.permute.xlu0 %566
        %v568 = vlaneseq
        %v569 = vshrl.u32 %v568, 7
        %v570 = vadd.s32 %v569, 24
        %571 = vset.pattern.permute.xlu0 %v570
        %572 = vperm.xlu0 %571, %v135
        %v573 = vpop.permute.xlu0 %572
        %v574 = vlaneseq
        %v575 = vshrl.u32 %v574, 7
        %v576 = vadd.s32 %v575, 16
        %577 = vset.pattern.permute.xlu0 %v576
        %578 = vperm.xlu0 %577, %v148
        %v579 = vpop.permute.xlu0 %578
        %v580 = vlaneseq
        %v581 = vshrl.u32 %v580, 7
        %v582 = vadd.s32 %v581, 24
        %583 = vset.pattern.permute.xlu0 %v582
        %584 = vperm.xlu0 %583, %v148
        %v585 = vpop.permute.xlu0 %584
        %v586 = vlaneseq
        %v587 = vshrl.u32 %v586, 7
        %v588 = vadd.s32 %v587, 16
        %589 = vset.pattern.permute.xlu0 %v588
        %590 = vperm.xlu0 %589, %v161
        %v591 = vpop.permute.xlu0 %590
        %v592 = vlaneseq
        %v593 = vshrl.u32 %v592, 7
        %v594 = vadd.s32 %v593, 24
        %595 = vset.pattern.permute.xlu0 %v594
        %596 = vperm.xlu0 %595, %v161
        %v597 = vpop.permute.xlu0 %596
        %v598 = vlaneseq
        %v599 = vshrl.u32 %v598, 7
        %v600 = vadd.s32 %v599, 16
        %601 = vset.pattern.permute.xlu0 %v600
        %602 = vperm.xlu0 %601, %v174
        %v603 = vpop.permute.xlu0 %602
        %v604 = vlaneseq
        %v605 = vshrl.u32 %v604, 7
        %v606 = vadd.s32 %v605, 24
        %607 = vset.pattern.permute.xlu0 %v606
        %608 = vperm.xlu0 %607, %v174
        %v609 = vpop.permute.xlu0 %608
        %v610 = vlaneseq
        %v611 = vshrl.u32 %v610, 7
        %v612 = vadd.s32 %v611, 16
        %613 = vset.pattern.permute.xlu0 %v612
        %614 = vperm.xlu0 %613, %v187
        %v615 = vpop.permute.xlu0 %614
        %v616 = vlaneseq
        %v617 = vshrl.u32 %v616, 7
        %v618 = vadd.s32 %v617, 24
        %619 = vset.pattern.permute.xlu0 %v618
        %620 = vperm.xlu0 %619, %v187
        %v621 = vpop.permute.xlu0 %620
        %v622 = vlaneseq
        %v623 = vshrl.u32 %v622, 7
        %v624 = vadd.s32 %v623, 16
        %625 = vset.pattern.permute.xlu0 %v624
        %626 = vperm.xlu0 %625, %v200
        %v627 = vpop.permute.xlu0 %626
        %v628 = vlaneseq
        %v629 = vshrl.u32 %v628, 7
        %v630 = vadd.s32 %v629, 24
        %631 = vset.pattern.permute.xlu0 %v630
        %632 = vperm.xlu0 %631, %v200
        %v633 = vpop.permute.xlu0 %632
        %v634 = vlaneseq
        %v635 = vshrl.u32 %v634, 7
        %v636 = vadd.s32 %v635, 16
        %637 = vset.pattern.permute.xlu0 %v636
        %638 = vperm.xlu0 %637, %v213
        %v639 = vpop.permute.xlu0 %638
        %v640 = vlaneseq
        %v641 = vshrl.u32 %v640, 7
        %v642 = vadd.s32 %v641, 24
        %643 = vset.pattern.permute.xlu0 %v642
        %644 = vperm.xlu0 %643, %v213
        %v645 = vpop.permute.xlu0 %644
        %v646 = vlaneseq
        %v647 = vshrl.u32 %v646, 7
        %v648 = vadd.s32 %v647, 16
        %649 = vset.pattern.permute.xlu0 %v648
        %650 = vperm.xlu0 %649, %v226
        %v651 = vpop.permute.xlu0 %650
        %v652 = vlaneseq
        %v653 = vshrl.u32 %v652, 7
        %v654 = vadd.s32 %v653, 24
        %655 = vset.pattern.permute.xlu0 %v654
        %656 = vperm.xlu0 %655, %v226
        %v657 = vpop.permute.xlu0 %656
        %v658 = vrot.slane %v591, 4
        %v659 = vsel %vm240, %v658, %v567
        %v660 = vrot.slane %v567, 4
        %v661 = vsel %vm240, %v591, %v660
        %v663 = vunpack.c.l.s4 1983009808
        %v664 = vunpack.c.0.s8 %v663
        %v665 = vperm.slane %v659, %v664
        %v667 = vunpack.c.l.s4 1983009808
        %v668 = vunpack.c.0.s8 %v667
        %v669 = vperm.slane %v661, %v668
        %v670 = vrot.slane %v603, 4
        %v671 = vsel %vm240, %v670, %v579
        %v672 = vrot.slane %v579, 4
        %v673 = vsel %vm240, %v603, %v672
        %v675 = vunpack.c.l.s4 1983009808
        %v676 = vunpack.c.0.s8 %v675
        %v677 = vperm.slane %v671, %v676
        %v679 = vunpack.c.l.s4 1983009808
        %v680 = vunpack.c.0.s8 %v679
        %v681 = vperm.slane %v673, %v680
        %v682 = vrot.slane %v639, 4
        %v683 = vsel %vm240, %v682, %v615
        %v684 = vrot.slane %v615, 4
        %v685 = vsel %vm240, %v639, %v684
        %v687 = vunpack.c.l.s4 1983009808
        %v688 = vunpack.c.0.s8 %v687
        %v689 = vperm.slane %v683, %v688
        %v691 = vunpack.c.l.s4 1983009808
        %v692 = vunpack.c.0.s8 %v691
        %v693 = vperm.slane %v685, %v692
        %v694 = vrot.slane %v651, 4
        %v695 = vsel %vm240, %v694, %v627
        %v696 = vrot.slane %v627, 4
        %v697 = vsel %vm240, %v651, %v696
        %v699 = vunpack.c.l.s4 1983009808
        %v700 = vunpack.c.0.s8 %v699
        %v701 = vperm.slane %v695, %v700
        %v703 = vunpack.c.l.s4 1983009808
        %v704 = vunpack.c.0.s8 %v703
        %v705 = vperm.slane %v697, %v704
        %v706 = vrot.slane %v677, 4
        %v707 = vsel %vm240, %v706, %v665
        %v708 = vrot.slane %v665, 4
        %v709 = vsel %vm240, %v677, %v708
        %v711 = vunpack.c.l.s4 1934713408
        %v712 = vunpack.c.0.s8 %v711
        %v713 = vperm.slane %v707, %v712
        %v715 = vunpack.c.l.s4 1934713408
        %v716 = vunpack.c.0.s8 %v715
        %v717 = vperm.slane %v709, %v716
        %v718 = vrot.slane %v681, 4
        %v719 = vsel %vm240, %v718, %v669
        %v720 = vrot.slane %v669, 4
        %v721 = vsel %vm240, %v681, %v720
        %v723 = vunpack.c.l.s4 1934713408
        %v724 = vunpack.c.0.s8 %v723
        %v725 = vperm.slane %v719, %v724
        %v727 = vunpack.c.l.s4 1934713408
        %v728 = vunpack.c.0.s8 %v727
        %v729 = vperm.slane %v721, %v728
        %v730 = vrot.slane %v701, 4
        %v731 = vsel %vm240, %v730, %v689
        %v732 = vrot.slane %v689, 4
        %v733 = vsel %vm240, %v701, %v732
        %v735 = vunpack.c.l.s4 1934713408
        %v736 = vunpack.c.0.s8 %v735
        %v737 = vperm.slane %v731, %v736
        %v739 = vunpack.c.l.s4 1934713408
        %v740 = vunpack.c.0.s8 %v739
        %v741 = vperm.slane %v733, %v740
        %v742 = vrot.slane %v705, 4
        %v743 = vsel %vm240, %v742, %v693
        %v744 = vrot.slane %v693, 4
        %v745 = vsel %vm240, %v705, %v744
        %v747 = vunpack.c.l.s4 1934713408
        %v748 = vunpack.c.0.s8 %v747
        %v749 = vperm.slane %v743, %v748
        %v751 = vunpack.c.l.s4 1934713408
        %v752 = vunpack.c.0.s8 %v751
        %v753 = vperm.slane %v745, %v752
        %v754 = vrot.slane %v737, 4
        %v755 = vsel %vm240, %v754, %v713
        %v756 = vrot.slane %v713, 4
        %v757 = vsel %vm240, %v737, %v756
        %v758 = vrot.slane %v741, 4
        %v759 = vsel %vm240, %v758, %v717
        %v760 = vrot.slane %v717, 4
        %v761 = vsel %vm240, %v741, %v760
        %v762 = vrot.slane %v749, 4
        %v763 = vsel %vm240, %v762, %v725
        %v764 = vrot.slane %v725, 4
        %v765 = vsel %vm240, %v749, %v764
        %v766 = vrot.slane %v753, 4
        %v767 = vsel %vm240, %v766, %v729
        %v768 = vrot.slane %v729, 4
        %v769 = vsel %vm240, %v753, %v768
        %v770 = vrot.slane %v597, 4
        %v771 = vsel %vm240, %v770, %v573
        %v772 = vrot.slane %v573, 4
        %v773 = vsel %vm240, %v597, %v772
        %v775 = vunpack.c.l.s4 1983009808
        %v776 = vunpack.c.0.s8 %v775
        %v777 = vperm.slane %v771, %v776
        %v779 = vunpack.c.l.s4 1983009808
        %v780 = vunpack.c.0.s8 %v779
        %v781 = vperm.slane %v773, %v780
        %v782 = vrot.slane %v609, 4
        %v783 = vsel %vm240, %v782, %v585
        %v784 = vrot.slane %v585, 4
        %v785 = vsel %vm240, %v609, %v784
        %v787 = vunpack.c.l.s4 1983009808
        %v788 = vunpack.c.0.s8 %v787
        %v789 = vperm.slane %v783, %v788
        %v791 = vunpack.c.l.s4 1983009808
        %v792 = vunpack.c.0.s8 %v791
        %v793 = vperm.slane %v785, %v792
        %v794 = vrot.slane %v645, 4
        %v795 = vsel %vm240, %v794, %v621
        %v796 = vrot.slane %v621, 4
        %v797 = vsel %vm240, %v645, %v796
        %v799 = vunpack.c.l.s4 1983009808
        %v800 = vunpack.c.0.s8 %v799
        %v801 = vperm.slane %v795, %v800
        %v803 = vunpack.c.l.s4 1983009808
        %v804 = vunpack.c.0.s8 %v803
        %v805 = vperm.slane %v797, %v804
        %v806 = vrot.slane %v657, 4
        %v807 = vsel %vm240, %v806, %v633
        %v808 = vrot.slane %v633, 4
        %v809 = vsel %vm240, %v657, %v808
        %v811 = vunpack.c.l.s4 1983009808
        %v812 = vunpack.c.0.s8 %v811
        %v813 = vperm.slane %v807, %v812
        %v815 = vunpack.c.l.s4 1983009808
        %v816 = vunpack.c.0.s8 %v815
        %v817 = vperm.slane %v809, %v816
        %v818 = vrot.slane %v789, 4
        %v819 = vsel %vm240, %v818, %v777
        %v820 = vrot.slane %v777, 4
        %v821 = vsel %vm240, %v789, %v820
        %v823 = vunpack.c.l.s4 1934713408
        %v824 = vunpack.c.0.s8 %v823
        %v825 = vperm.slane %v819, %v824
        %v827 = vunpack.c.l.s4 1934713408
        %v828 = vunpack.c.0.s8 %v827
        %v829 = vperm.slane %v821, %v828
        %v830 = vrot.slane %v793, 4
        %v831 = vsel %vm240, %v830, %v781
        %v832 = vrot.slane %v781, 4
        %v833 = vsel %vm240, %v793, %v832
        %v835 = vunpack.c.l.s4 1934713408
        %v836 = vunpack.c.0.s8 %v835
        %v837 = vperm.slane %v831, %v836
        %v839 = vunpack.c.l.s4 1934713408
        %v840 = vunpack.c.0.s8 %v839
        %v841 = vperm.slane %v833, %v840
        %v842 = vrot.slane %v813, 4
        %v843 = vsel %vm240, %v842, %v801
        %v844 = vrot.slane %v801, 4
        %v845 = vsel %vm240, %v813, %v844
        %v847 = vunpack.c.l.s4 1934713408
        %v848 = vunpack.c.0.s8 %v847
        %v849 = vperm.slane %v843, %v848
        %v851 = vunpack.c.l.s4 1934713408
        %v852 = vunpack.c.0.s8 %v851
        %v853 = vperm.slane %v845, %v852
        %v854 = vrot.slane %v817, 4
        %v855 = vsel %vm240, %v854, %v805
        %v856 = vrot.slane %v805, 4
        %v857 = vsel %vm240, %v817, %v856
        %v859 = vunpack.c.l.s4 1934713408
        %v860 = vunpack.c.0.s8 %v859
        %v861 = vperm.slane %v855, %v860
        %v863 = vunpack.c.l.s4 1934713408
        %v864 = vunpack.c.0.s8 %v863
        %v865 = vperm.slane %v857, %v864
        %v866 = vrot.slane %v849, 4
        %v867 = vsel %vm240, %v866, %v825
        %v868 = vrot.slane %v825, 4
        %v869 = vsel %vm240, %v849, %v868
        %v870 = vrot.slane %v853, 4
        %v871 = vsel %vm240, %v870, %v829
        %v872 = vrot.slane %v829, 4
        %v873 = vsel %vm240, %v853, %v872
        %v874 = vrot.slane %v861, 4
        %v875 = vsel %vm240, %v874, %v837
        %v876 = vrot.slane %v837, 4
        %v877 = vsel %vm240, %v861, %v876
        %v878 = vrot.slane %v865, 4
        %v879 = vsel %vm240, %v878, %v841
        %v880 = vrot.slane %v841, 4
        %v881 = vsel %vm240, %v865, %v880
        %883 = vrot.lane.b32.xlu0 %v757, 2
        %v884 = vpop.permute.xlu0 %883
        %887 = vrot.lane.b32.xlu0 %v759, 4
        %v888 = vpop.permute.xlu0 %887
        %891 = vrot.lane.b32.xlu0 %v761, 6
        %v892 = vpop.permute.xlu0 %891
        %895 = vrot.lane.b32.xlu0 %v763, 8
        %v896 = vpop.permute.xlu0 %895
        %899 = vrot.lane.b32.xlu0 %v765, 10
        %v900 = vpop.permute.xlu0 %899
        %903 = vrot.lane.b32.xlu0 %v767, 12
        %v904 = vpop.permute.xlu0 %903
        %907 = vrot.lane.b32.xlu0 %v769, 14
        %v908 = vpop.permute.xlu0 %907
        %911 = vrot.lane.b32.xlu0 %v867, 16
        %v912 = vpop.permute.xlu0 %911
        %915 = vrot.lane.b32.xlu0 %v869, 18
        %v916 = vpop.permute.xlu0 %915
        %919 = vrot.lane.b32.xlu0 %v871, 20
        %v920 = vpop.permute.xlu0 %919
        %923 = vrot.lane.b32.xlu0 %v873, 22
        %v924 = vpop.permute.xlu0 %923
        %927 = vrot.lane.b32.xlu0 %v875, 24
        %v928 = vpop.permute.xlu0 %927
        %931 = vrot.lane.b32.xlu0 %v877, 26
        %v932 = vpop.permute.xlu0 %931
        %935 = vrot.lane.b32.xlu0 %v879, 28
        %v936 = vpop.permute.xlu0 %935
        %939 = vrot.lane.b32.xlu0 %v881, 30
        %v940 = vpop.permute.xlu0 %939
        %v942 = vsel %vm524, %v755, %v884
        %v943 = vsel %vm526, %v942, %v888
        %v944 = vsel %vm528, %v943, %v892
        %v945 = vsel %vm530, %v944, %v896
        %v946 = vsel %vm532, %v945, %v900
        %v947 = vsel %vm534, %v946, %v904
        %v948 = vsel %vm536, %v947, %v908
        %v949 = vsel %vm538, %v948, %v912
        %v950 = vsel %vm540, %v949, %v916
        %v951 = vsel %vm542, %v950, %v920
        %v952 = vsel %vm544, %v951, %v924
        %v953 = vsel %vm546, %v952, %v928
        %v954 = vsel %vm548, %v953, %v932
        %v955 = vsel %vm550, %v954, %v936
        %v956 = vsel %vm552, %v955, %v940
        %958 = vrot.lane.b32.xlu0 %v956, 64
        %v959 = vpop.permute.xlu0 %958
        %vm961 = vcmask 785920
        %962 = vst.msk [vmem:[%s133] sm:$0xff] %vm961, %v959
        %963 = vrot.lane.b32.xlu0 %v956, 96
        %v964 = vpop.permute.xlu0 %963
        %vm966 = vcmask 1048320
        %967 = vst.msk [vmem:[%s133] sm:$0xff] %vm966, %v964
        %v968 = vlaneseq
        %v969 = vshrl.u32 %v968, 7
        %v970 = vadd.s32 %v969, 32
        %971 = vset.pattern.permute.xlu0 %v970
        %972 = vperm.xlu0 %971, %v135
        %v973 = vpop.permute.xlu0 %972
        %v974 = vlaneseq
        %v975 = vshrl.u32 %v974, 7
        %v976 = vadd.s32 %v975, 40
        %977 = vset.pattern.permute.xlu0 %v976
        %978 = vperm.xlu0 %977, %v135
        %v979 = vpop.permute.xlu0 %978
        %v980 = vlaneseq
        %v981 = vshrl.u32 %v980, 7
        %v982 = vadd.s32 %v981, 32
        %983 = vset.pattern.permute.xlu0 %v982
        %984 = vperm.xlu0 %983, %v148
        %v985 = vpop.permute.xlu0 %984
        %v986 = vlaneseq
        %v987 = vshrl.u32 %v986, 7
        %v988 = vadd.s32 %v987, 40
        %989 = vset.pattern.permute.xlu0 %v988
        %990 = vperm.xlu0 %989, %v148
        %v991 = vpop.permute.xlu0 %990
        %v992 = vlaneseq
        %v993 = vshrl.u32 %v992, 7
        %v994 = vadd.s32 %v993, 32
        %995 = vset.pattern.permute.xlu0 %v994
        %996 = vperm.xlu0 %995, %v161
        %v997 = vpop.permute.xlu0 %996
        %v998 = vlaneseq
        %v999 = vshrl.u32 %v998, 7
        %v1000 = vadd.s32 %v999, 40
        %1001 = vset.pattern.permute.xlu0 %v1000
        %1002 = vperm.xlu0 %1001, %v161
        %v1003 = vpop.permute.xlu0 %1002
        %v1004 = vlaneseq
        %v1005 = vshrl.u32 %v1004, 7
        %v1006 = vadd.s32 %v1005, 32
        %1007 = vset.pattern.permute.xlu0 %v1006
        %1008 = vperm.xlu0 %1007, %v174
        %v1009 = vpop.permute.xlu0 %1008
        %v1010 = vlaneseq
        %v1011 = vshrl.u32 %v1010, 7
        %v1012 = vadd.s32 %v1011, 40
        %1013 = vset.pattern.permute.xlu0 %v1012
        %1014 = vperm.xlu0 %1013, %v174
        %v1015 = vpop.permute.xlu0 %1014
        %v1016 = vlaneseq
        %v1017 = vshrl.u32 %v1016, 7
        %v1018 = vadd.s32 %v1017, 32
        %1019 = vset.pattern.permute.xlu0 %v1018
        %1020 = vperm.xlu0 %1019, %v187
        %v1021 = vpop.permute.xlu0 %1020
        %v1022 = vlaneseq
        %v1023 = vshrl.u32 %v1022, 7
        %v1024 = vadd.s32 %v1023, 40
        %1025 = vset.pattern.permute.xlu0 %v1024
        %1026 = vperm.xlu0 %1025, %v187
        %v1027 = vpop.permute.xlu0 %1026
        %v1028 = vlaneseq
        %v1029 = vshrl.u32 %v1028, 7
        %v1030 = vadd.s32 %v1029, 32
        %1031 = vset.pattern.permute.xlu0 %v1030
        %1032 = vperm.xlu0 %1031, %v200
        %v1033 = vpop.permute.xlu0 %1032
        %v1034 = vlaneseq
        %v1035 = vshrl.u32 %v1034, 7
        %v1036 = vadd.s32 %v1035, 40
        %1037 = vset.pattern.permute.xlu0 %v1036
        %1038 = vperm.xlu0 %1037, %v200
        %v1039 = vpop.permute.xlu0 %1038
        %v1040 = vlaneseq
        %v1041 = vshrl.u32 %v1040, 7
        %v1042 = vadd.s32 %v1041, 32
        %1043 = vset.pattern.permute.xlu0 %v1042
        %1044 = vperm.xlu0 %1043, %v213
        %v1045 = vpop.permute.xlu0 %1044
        %v1046 = vlaneseq
        %v1047 = vshrl.u32 %v1046, 7
        %v1048 = vadd.s32 %v1047, 40
        %1049 = vset.pattern.permute.xlu0 %v1048
        %1050 = vperm.xlu0 %1049, %v213
        %v1051 = vpop.permute.xlu0 %1050
        %v1052 = vlaneseq
        %v1053 = vshrl.u32 %v1052, 7
        %v1054 = vadd.s32 %v1053, 32
        %1055 = vset.pattern.permute.xlu0 %v1054
        %1056 = vperm.xlu0 %1055, %v226
        %v1057 = vpop.permute.xlu0 %1056
        %v1058 = vlaneseq
        %v1059 = vshrl.u32 %v1058, 7
        %v1060 = vadd.s32 %v1059, 40
        %1061 = vset.pattern.permute.xlu0 %v1060
        %1062 = vperm.xlu0 %1061, %v226
        %v1063 = vpop.permute.xlu0 %1062
        %v1064 = vrot.slane %v997, 4
        %v1065 = vsel %vm240, %v1064, %v973
        %v1066 = vrot.slane %v973, 4
        %v1067 = vsel %vm240, %v997, %v1066
        %v1069 = vunpack.c.l.s4 1983009808
        %v1070 = vunpack.c.0.s8 %v1069
        %v1071 = vperm.slane %v1065, %v1070
        %v1073 = vunpack.c.l.s4 1983009808
        %v1074 = vunpack.c.0.s8 %v1073
        %v1075 = vperm.slane %v1067, %v1074
        %v1076 = vrot.slane %v1009, 4
        %v1077 = vsel %vm240, %v1076, %v985
        %v1078 = vrot.slane %v985, 4
        %v1079 = vsel %vm240, %v1009, %v1078
        %v1081 = vunpack.c.l.s4 1983009808
        %v1082 = vunpack.c.0.s8 %v1081
        %v1083 = vperm.slane %v1077, %v1082
        %v1085 = vunpack.c.l.s4 1983009808
        %v1086 = vunpack.c.0.s8 %v1085
        %v1087 = vperm.slane %v1079, %v1086
        %v1088 = vrot.slane %v1045, 4
        %v1089 = vsel %vm240, %v1088, %v1021
        %v1090 = vrot.slane %v1021, 4
        %v1091 = vsel %vm240, %v1045, %v1090
        %v1093 = vunpack.c.l.s4 1983009808
        %v1094 = vunpack.c.0.s8 %v1093
        %v1095 = vperm.slane %v1089, %v1094
        %v1097 = vunpack.c.l.s4 1983009808
        %v1098 = vunpack.c.0.s8 %v1097
        %v1099 = vperm.slane %v1091, %v1098
        %v1100 = vrot.slane %v1057, 4
        %v1101 = vsel %vm240, %v1100, %v1033
        %v1102 = vrot.slane %v1033, 4
        %v1103 = vsel %vm240, %v1057, %v1102
        %v1105 = vunpack.c.l.s4 1983009808
        %v1106 = vunpack.c.0.s8 %v1105
        %v1107 = vperm.slane %v1101, %v1106
        %v1109 = vunpack.c.l.s4 1983009808
        %v1110 = vunpack.c.0.s8 %v1109
        %v1111 = vperm.slane %v1103, %v1110
        %v1112 = vrot.slane %v1083, 4
        %v1113 = vsel %vm240, %v1112, %v1071
        %v1114 = vrot.slane %v1071, 4
        %v1115 = vsel %vm240, %v1083, %v1114
        %v1117 = vunpack.c.l.s4 1934713408
        %v1118 = vunpack.c.0.s8 %v1117
        %v1119 = vperm.slane %v1113, %v1118
        %v1121 = vunpack.c.l.s4 1934713408
        %v1122 = vunpack.c.0.s8 %v1121
        %v1123 = vperm.slane %v1115, %v1122
        %v1124 = vrot.slane %v1087, 4
        %v1125 = vsel %vm240, %v1124, %v1075
        %v1126 = vrot.slane %v1075, 4
        %v1127 = vsel %vm240, %v1087, %v1126
        %v1129 = vunpack.c.l.s4 1934713408
        %v1130 = vunpack.c.0.s8 %v1129
        %v1131 = vperm.slane %v1125, %v1130
        %v1133 = vunpack.c.l.s4 1934713408
        %v1134 = vunpack.c.0.s8 %v1133
        %v1135 = vperm.slane %v1127, %v1134
        %v1136 = vrot.slane %v1107, 4
        %v1137 = vsel %vm240, %v1136, %v1095
        %v1138 = vrot.slane %v1095, 4
        %v1139 = vsel %vm240, %v1107, %v1138
        %v1141 = vunpack.c.l.s4 1934713408
        %v1142 = vunpack.c.0.s8 %v1141
        %v1143 = vperm.slane %v1137, %v1142
        %v1145 = vunpack.c.l.s4 1934713408
        %v1146 = vunpack.c.0.s8 %v1145
        %v1147 = vperm.slane %v1139, %v1146
        %v1148 = vrot.slane %v1111, 4
        %v1149 = vsel %vm240, %v1148, %v1099
        %v1150 = vrot.slane %v1099, 4
        %v1151 = vsel %vm240, %v1111, %v1150
        %v1153 = vunpack.c.l.s4 1934713408
        %v1154 = vunpack.c.0.s8 %v1153
        %v1155 = vperm.slane %v1149, %v1154
        %v1157 = vunpack.c.l.s4 1934713408
        %v1158 = vunpack.c.0.s8 %v1157
        %v1159 = vperm.slane %v1151, %v1158
        %v1160 = vrot.slane %v1143, 4
        %v1161 = vsel %vm240, %v1160, %v1119
        %v1162 = vrot.slane %v1119, 4
        %v1163 = vsel %vm240, %v1143, %v1162
        %v1164 = vrot.slane %v1147, 4
        %v1165 = vsel %vm240, %v1164, %v1123
        %v1166 = vrot.slane %v1123, 4
        %v1167 = vsel %vm240, %v1147, %v1166
        %v1168 = vrot.slane %v1155, 4
        %v1169 = vsel %vm240, %v1168, %v1131
        %v1170 = vrot.slane %v1131, 4
        %v1171 = vsel %vm240, %v1155, %v1170
        %v1172 = vrot.slane %v1159, 4
        %v1173 = vsel %vm240, %v1172, %v1135
        %v1174 = vrot.slane %v1135, 4
        %v1175 = vsel %vm240, %v1159, %v1174
        %v1176 = vrot.slane %v1003, 4
        %v1177 = vsel %vm240, %v1176, %v979
        %v1178 = vrot.slane %v979, 4
        %v1179 = vsel %vm240, %v1003, %v1178
        %v1181 = vunpack.c.l.s4 1983009808
        %v1182 = vunpack.c.0.s8 %v1181
        %v1183 = vperm.slane %v1177, %v1182
        %v1185 = vunpack.c.l.s4 1983009808
        %v1186 = vunpack.c.0.s8 %v1185
        %v1187 = vperm.slane %v1179, %v1186
        %v1188 = vrot.slane %v1015, 4
        %v1189 = vsel %vm240, %v1188, %v991
        %v1190 = vrot.slane %v991, 4
        %v1191 = vsel %vm240, %v1015, %v1190
        %v1193 = vunpack.c.l.s4 1983009808
        %v1194 = vunpack.c.0.s8 %v1193
        %v1195 = vperm.slane %v1189, %v1194
        %v1197 = vunpack.c.l.s4 1983009808
        %v1198 = vunpack.c.0.s8 %v1197
        %v1199 = vperm.slane %v1191, %v1198
        %v1200 = vrot.slane %v1051, 4
        %v1201 = vsel %vm240, %v1200, %v1027
        %v1202 = vrot.slane %v1027, 4
        %v1203 = vsel %vm240, %v1051, %v1202
        %v1205 = vunpack.c.l.s4 1983009808
        %v1206 = vunpack.c.0.s8 %v1205
        %v1207 = vperm.slane %v1201, %v1206
        %v1209 = vunpack.c.l.s4 1983009808
        %v1210 = vunpack.c.0.s8 %v1209
        %v1211 = vperm.slane %v1203, %v1210
        %v1212 = vrot.slane %v1063, 4
        %v1213 = vsel %vm240, %v1212, %v1039
        %v1214 = vrot.slane %v1039, 4
        %v1215 = vsel %vm240, %v1063, %v1214
        %v1217 = vunpack.c.l.s4 1983009808
        %v1218 = vunpack.c.0.s8 %v1217
        %v1219 = vperm.slane %v1213, %v1218
        %v1221 = vunpack.c.l.s4 1983009808
        %v1222 = vunpack.c.0.s8 %v1221
        %v1223 = vperm.slane %v1215, %v1222
        %v1224 = vrot.slane %v1195, 4
        %v1225 = vsel %vm240, %v1224, %v1183
        %v1226 = vrot.slane %v1183, 4
        %v1227 = vsel %vm240, %v1195, %v1226
        %v1229 = vunpack.c.l.s4 1934713408
        %v1230 = vunpack.c.0.s8 %v1229
        %v1231 = vperm.slane %v1225, %v1230
        %v1233 = vunpack.c.l.s4 1934713408
        %v1234 = vunpack.c.0.s8 %v1233
        %v1235 = vperm.slane %v1227, %v1234
        %v1236 = vrot.slane %v1199, 4
        %v1237 = vsel %vm240, %v1236, %v1187
        %v1238 = vrot.slane %v1187, 4
        %v1239 = vsel %vm240, %v1199, %v1238
        %v1241 = vunpack.c.l.s4 1934713408
        %v1242 = vunpack.c.0.s8 %v1241
        %v1243 = vperm.slane %v1237, %v1242
        %v1245 = vunpack.c.l.s4 1934713408
        %v1246 = vunpack.c.0.s8 %v1245
        %v1247 = vperm.slane %v1239, %v1246
        %v1248 = vrot.slane %v1219, 4
        %v1249 = vsel %vm240, %v1248, %v1207
        %v1250 = vrot.slane %v1207, 4
        %v1251 = vsel %vm240, %v1219, %v1250
        %v1253 = vunpack.c.l.s4 1934713408
        %v1254 = vunpack.c.0.s8 %v1253
        %v1255 = vperm.slane %v1249, %v1254
        %v1257 = vunpack.c.l.s4 1934713408
        %v1258 = vunpack.c.0.s8 %v1257
        %v1259 = vperm.slane %v1251, %v1258
        %v1260 = vrot.slane %v1223, 4
        %v1261 = vsel %vm240, %v1260, %v1211
        %v1262 = vrot.slane %v1211, 4
        %v1263 = vsel %vm240, %v1223, %v1262
        %v1265 = vunpack.c.l.s4 1934713408
        %v1266 = vunpack.c.0.s8 %v1265
        %v1267 = vperm.slane %v1261, %v1266
        %v1269 = vunpack.c.l.s4 1934713408
        %v1270 = vunpack.c.0.s8 %v1269
        %v1271 = vperm.slane %v1263, %v1270
        %v1272 = vrot.slane %v1255, 4
        %v1273 = vsel %vm240, %v1272, %v1231
        %v1274 = vrot.slane %v1231, 4
        %v1275 = vsel %vm240, %v1255, %v1274
        %v1276 = vrot.slane %v1259, 4
        %v1277 = vsel %vm240, %v1276, %v1235
        %v1278 = vrot.slane %v1235, 4
        %v1279 = vsel %vm240, %v1259, %v1278
        %v1280 = vrot.slane %v1267, 4
        %v1281 = vsel %vm240, %v1280, %v1243
        %v1282 = vrot.slane %v1243, 4
        %v1283 = vsel %vm240, %v1267, %v1282
        %v1284 = vrot.slane %v1271, 4
        %v1285 = vsel %vm240, %v1284, %v1247
        %v1286 = vrot.slane %v1247, 4
        %v1287 = vsel %vm240, %v1271, %v1286
        %1289 = vrot.lane.b32.xlu0 %v1163, 2
        %v1290 = vpop.permute.xlu0 %1289
        %1293 = vrot.lane.b32.xlu0 %v1165, 4
        %v1294 = vpop.permute.xlu0 %1293
        %1297 = vrot.lane.b32.xlu0 %v1167, 6
        %v1298 = vpop.permute.xlu0 %1297
        %1301 = vrot.lane.b32.xlu0 %v1169, 8
        %v1302 = vpop.permute.xlu0 %1301
        %1305 = vrot.lane.b32.xlu0 %v1171, 10
        %v1306 = vpop.permute.xlu0 %1305
        %1309 = vrot.lane.b32.xlu0 %v1173, 12
        %v1310 = vpop.permute.xlu0 %1309
        %1313 = vrot.lane.b32.xlu0 %v1175, 14
        %v1314 = vpop.permute.xlu0 %1313
        %1317 = vrot.lane.b32.xlu0 %v1273, 16
        %v1318 = vpop.permute.xlu0 %1317
        %1321 = vrot.lane.b32.xlu0 %v1275, 18
        %v1322 = vpop.permute.xlu0 %1321
        %1325 = vrot.lane.b32.xlu0 %v1277, 20
        %v1326 = vpop.permute.xlu0 %1325
        %1329 = vrot.lane.b32.xlu0 %v1279, 22
        %v1330 = vpop.permute.xlu0 %1329
        %1333 = vrot.lane.b32.xlu0 %v1281, 24
        %v1334 = vpop.permute.xlu0 %1333
        %1337 = vrot.lane.b32.xlu0 %v1283, 26
        %v1338 = vpop.permute.xlu0 %1337
        %1341 = vrot.lane.b32.xlu0 %v1285, 28
        %v1342 = vpop.permute.xlu0 %1341
        %1345 = vrot.lane.b32.xlu0 %v1287, 30
        %v1346 = vpop.permute.xlu0 %1345
        %v1348 = vsel %vm524, %v1161, %v1290
        %v1349 = vsel %vm526, %v1348, %v1294
        %v1350 = vsel %vm528, %v1349, %v1298
        %v1351 = vsel %vm530, %v1350, %v1302
        %v1352 = vsel %vm532, %v1351, %v1306
        %v1353 = vsel %vm534, %v1352, %v1310
        %v1354 = vsel %vm536, %v1353, %v1314
        %v1355 = vsel %vm538, %v1354, %v1318
        %v1356 = vsel %vm540, %v1355, %v1322
        %v1357 = vsel %vm542, %v1356, %v1326
        %v1358 = vsel %vm544, %v1357, %v1330
        %v1359 = vsel %vm546, %v1358, %v1334
        %v1360 = vsel %vm548, %v1359, %v1338
        %v1361 = vsel %vm550, %v1360, %v1342
        %v1362 = vsel %vm552, %v1361, %v1346
        %1363 = vst.msk [vmem:[%s133 + $0x8] sm:$0xff] %vm554, %v1362
        %1365 = vrot.lane.b32.xlu0 %v1362, 32
        %v1366 = vpop.permute.xlu0 %1365
        %1368 = vst.msk [vmem:[%s133 + $0x8] sm:$0xff] %vm560, %v1366
        %v1369 = vlaneseq
        %v1370 = vshrl.u32 %v1369, 7
        %v1371 = vadd.s32 %v1370, 48
        %1372 = vset.pattern.permute.xlu0 %v1371
        %1373 = vperm.xlu0 %1372, %v135
        %v1374 = vpop.permute.xlu0 %1373
        %v1375 = vlaneseq
        %v1376 = vshrl.u32 %v1375, 7
        %v1377 = vadd.s32 %v1376, 56
        %1378 = vset.pattern.permute.xlu0 %v1377
        %1379 = vperm.xlu0 %1378, %v135
        %v1380 = vpop.permute.xlu0 %1379
        %v1381 = vlaneseq
        %v1382 = vshrl.u32 %v1381, 7
        %v1383 = vadd.s32 %v1382, 48
        %1384 = vset.pattern.permute.xlu0 %v1383
        %1385 = vperm.xlu0 %1384, %v148
        %v1386 = vpop.permute.xlu0 %1385
        %v1387 = vlaneseq
        %v1388 = vshrl.u32 %v1387, 7
        %v1389 = vadd.s32 %v1388, 56
        %1390 = vset.pattern.permute.xlu0 %v1389
        %1391 = vperm.xlu0 %1390, %v148
        %v1392 = vpop.permute.xlu0 %1391
        %v1393 = vlaneseq
        %v1394 = vshrl.u32 %v1393, 7
        %v1395 = vadd.s32 %v1394, 48
        %1396 = vset.pattern.permute.xlu0 %v1395
        %1397 = vperm.xlu0 %1396, %v161
        %v1398 = vpop.permute.xlu0 %1397
        %v1399 = vlaneseq
        %v1400 = vshrl.u32 %v1399, 7
        %v1401 = vadd.s32 %v1400, 56
        %1402 = vset.pattern.permute.xlu0 %v1401
        %1403 = vperm.xlu0 %1402, %v161
        %v1404 = vpop.permute.xlu0 %1403
        %v1405 = vlaneseq
        %v1406 = vshrl.u32 %v1405, 7
        %v1407 = vadd.s32 %v1406, 48
        %1408 = vset.pattern.permute.xlu0 %v1407
        %1409 = vperm.xlu0 %1408, %v174
        %v1410 = vpop.permute.xlu0 %1409
        %v1411 = vlaneseq
        %v1412 = vshrl.u32 %v1411, 7
        %v1413 = vadd.s32 %v1412, 56
        %1414 = vset.pattern.permute.xlu0 %v1413
        %1415 = vperm.xlu0 %1414, %v174
        %v1416 = vpop.permute.xlu0 %1415
        %v1417 = vlaneseq
        %v1418 = vshrl.u32 %v1417, 7
        %v1419 = vadd.s32 %v1418, 48
        %1420 = vset.pattern.permute.xlu0 %v1419
        %1421 = vperm.xlu0 %1420, %v187
        %v1422 = vpop.permute.xlu0 %1421
        %v1423 = vlaneseq
        %v1424 = vshrl.u32 %v1423, 7
        %v1425 = vadd.s32 %v1424, 56
        %1426 = vset.pattern.permute.xlu0 %v1425
        %1427 = vperm.xlu0 %1426, %v187
        %v1428 = vpop.permute.xlu0 %1427
        %v1429 = vlaneseq
        %v1430 = vshrl.u32 %v1429, 7
        %v1431 = vadd.s32 %v1430, 48
        %1432 = vset.pattern.permute.xlu0 %v1431
        %1433 = vperm.xlu0 %1432, %v200
        %v1434 = vpop.permute.xlu0 %1433
        %v1435 = vlaneseq
        %v1436 = vshrl.u32 %v1435, 7
        %v1437 = vadd.s32 %v1436, 56
        %1438 = vset.pattern.permute.xlu0 %v1437
        %1439 = vperm.xlu0 %1438, %v200
        %v1440 = vpop.permute.xlu0 %1439
        %v1441 = vlaneseq
        %v1442 = vshrl.u32 %v1441, 7
        %v1443 = vadd.s32 %v1442, 48
        %1444 = vset.pattern.permute.xlu0 %v1443
        %1445 = vperm.xlu0 %1444, %v213
        %v1446 = vpop.permute.xlu0 %1445
        %v1447 = vlaneseq
        %v1448 = vshrl.u32 %v1447, 7
        %v1449 = vadd.s32 %v1448, 56
        %1450 = vset.pattern.permute.xlu0 %v1449
        %1451 = vperm.xlu0 %1450, %v213
        %v1452 = vpop.permute.xlu0 %1451
        %v1453 = vlaneseq
        %v1454 = vshrl.u32 %v1453, 7
        %v1455 = vadd.s32 %v1454, 48
        %1456 = vset.pattern.permute.xlu0 %v1455
        %1457 = vperm.xlu0 %1456, %v226
        %v1458 = vpop.permute.xlu0 %1457
        %v1459 = vlaneseq
        %v1460 = vshrl.u32 %v1459, 7
        %v1461 = vadd.s32 %v1460, 56
        %1462 = vset.pattern.permute.xlu0 %v1461
        %1463 = vperm.xlu0 %1462, %v226
        %v1464 = vpop.permute.xlu0 %1463
        %v1465 = vrot.slane %v1398, 4
        %v1466 = vsel %vm240, %v1465, %v1374
        %v1467 = vrot.slane %v1374, 4
        %v1468 = vsel %vm240, %v1398, %v1467
        %v1470 = vunpack.c.l.s4 1983009808
        %v1471 = vunpack.c.0.s8 %v1470
        %v1472 = vperm.slane %v1466, %v1471
        %v1474 = vunpack.c.l.s4 1983009808
        %v1475 = vunpack.c.0.s8 %v1474
        %v1476 = vperm.slane %v1468, %v1475
        %v1477 = vrot.slane %v1410, 4
        %v1478 = vsel %vm240, %v1477, %v1386
        %v1479 = vrot.slane %v1386, 4
        %v1480 = vsel %vm240, %v1410, %v1479
        %v1482 = vunpack.c.l.s4 1983009808
        %v1483 = vunpack.c.0.s8 %v1482
        %v1484 = vperm.slane %v1478, %v1483
        %v1486 = vunpack.c.l.s4 1983009808
        %v1487 = vunpack.c.0.s8 %v1486
        %v1488 = vperm.slane %v1480, %v1487
        %v1489 = vrot.slane %v1446, 4
        %v1490 = vsel %vm240, %v1489, %v1422
        %v1491 = vrot.slane %v1422, 4
        %v1492 = vsel %vm240, %v1446, %v1491
        %v1494 = vunpack.c.l.s4 1983009808
        %v1495 = vunpack.c.0.s8 %v1494
        %v1496 = vperm.slane %v1490, %v1495
        %v1498 = vunpack.c.l.s4 1983009808
        %v1499 = vunpack.c.0.s8 %v1498
        %v1500 = vperm.slane %v1492, %v1499
        %v1501 = vrot.slane %v1458, 4
        %v1502 = vsel %vm240, %v1501, %v1434
        %v1503 = vrot.slane %v1434, 4
        %v1504 = vsel %vm240, %v1458, %v1503
        %v1506 = vunpack.c.l.s4 1983009808
        %v1507 = vunpack.c.0.s8 %v1506
        %v1508 = vperm.slane %v1502, %v1507
        %v1510 = vunpack.c.l.s4 1983009808
        %v1511 = vunpack.c.0.s8 %v1510
        %v1512 = vperm.slane %v1504, %v1511
        %v1513 = vrot.slane %v1484, 4
        %v1514 = vsel %vm240, %v1513, %v1472
        %v1515 = vrot.slane %v1472, 4
        %v1516 = vsel %vm240, %v1484, %v1515
        %v1518 = vunpack.c.l.s4 1934713408
        %v1519 = vunpack.c.0.s8 %v1518
        %v1520 = vperm.slane %v1514, %v1519
        %v1522 = vunpack.c.l.s4 1934713408
        %v1523 = vunpack.c.0.s8 %v1522
        %v1524 = vperm.slane %v1516, %v1523
        %v1525 = vrot.slane %v1488, 4
        %v1526 = vsel %vm240, %v1525, %v1476
        %v1527 = vrot.slane %v1476, 4
        %v1528 = vsel %vm240, %v1488, %v1527
        %v1530 = vunpack.c.l.s4 1934713408
        %v1531 = vunpack.c.0.s8 %v1530
        %v1532 = vperm.slane %v1526, %v1531
        %v1534 = vunpack.c.l.s4 1934713408
        %v1535 = vunpack.c.0.s8 %v1534
        %v1536 = vperm.slane %v1528, %v1535
        %v1537 = vrot.slane %v1508, 4
        %v1538 = vsel %vm240, %v1537, %v1496
        %v1539 = vrot.slane %v1496, 4
        %v1540 = vsel %vm240, %v1508, %v1539
        %v1542 = vunpack.c.l.s4 1934713408
        %v1543 = vunpack.c.0.s8 %v1542
        %v1544 = vperm.slane %v1538, %v1543
        %v1546 = vunpack.c.l.s4 1934713408
        %v1547 = vunpack.c.0.s8 %v1546
        %v1548 = vperm.slane %v1540, %v1547
        %v1549 = vrot.slane %v1512, 4
        %v1550 = vsel %vm240, %v1549, %v1500
        %v1551 = vrot.slane %v1500, 4
        %v1552 = vsel %vm240, %v1512, %v1551
        %v1554 = vunpack.c.l.s4 1934713408
        %v1555 = vunpack.c.0.s8 %v1554
        %v1556 = vperm.slane %v1550, %v1555
        %v1558 = vunpack.c.l.s4 1934713408
        %v1559 = vunpack.c.0.s8 %v1558
        %v1560 = vperm.slane %v1552, %v1559
        %v1561 = vrot.slane %v1544, 4
        %v1562 = vsel %vm240, %v1561, %v1520
        %v1563 = vrot.slane %v1520, 4
        %v1564 = vsel %vm240, %v1544, %v1563
        %v1565 = vrot.slane %v1548, 4
        %v1566 = vsel %vm240, %v1565, %v1524
        %v1567 = vrot.slane %v1524, 4
        %v1568 = vsel %vm240, %v1548, %v1567
        %v1569 = vrot.slane %v1556, 4
        %v1570 = vsel %vm240, %v1569, %v1532
        %v1571 = vrot.slane %v1532, 4
        %v1572 = vsel %vm240, %v1556, %v1571
        %v1573 = vrot.slane %v1560, 4
        %v1574 = vsel %vm240, %v1573, %v1536
        %v1575 = vrot.slane %v1536, 4
        %v1576 = vsel %vm240, %v1560, %v1575
        %v1577 = vrot.slane %v1404, 4
        %v1578 = vsel %vm240, %v1577, %v1380
        %v1579 = vrot.slane %v1380, 4
        %v1580 = vsel %vm240, %v1404, %v1579
        %v1582 = vunpack.c.l.s4 1983009808
        %v1583 = vunpack.c.0.s8 %v1582
        %v1584 = vperm.slane %v1578, %v1583
        %v1586 = vunpack.c.l.s4 1983009808
        %v1587 = vunpack.c.0.s8 %v1586
        %v1588 = vperm.slane %v1580, %v1587
        %v1589 = vrot.slane %v1416, 4
        %v1590 = vsel %vm240, %v1589, %v1392
        %v1591 = vrot.slane %v1392, 4
        %v1592 = vsel %vm240, %v1416, %v1591
        %v1594 = vunpack.c.l.s4 1983009808
        %v1595 = vunpack.c.0.s8 %v1594
        %v1596 = vperm.slane %v1590, %v1595
        %v1598 = vunpack.c.l.s4 1983009808
        %v1599 = vunpack.c.0.s8 %v1598
        %v1600 = vperm.slane %v1592, %v1599
        %v1601 = vrot.slane %v1452, 4
        %v1602 = vsel %vm240, %v1601, %v1428
        %v1603 = vrot.slane %v1428, 4
        %v1604 = vsel %vm240, %v1452, %v1603
        %v1606 = vunpack.c.l.s4 1983009808
        %v1607 = vunpack.c.0.s8 %v1606
        %v1608 = vperm.slane %v1602, %v1607
        %v1610 = vunpack.c.l.s4 1983009808
        %v1611 = vunpack.c.0.s8 %v1610
        %v1612 = vperm.slane %v1604, %v1611
        %v1613 = vrot.slane %v1464, 4
        %v1614 = vsel %vm240, %v1613, %v1440
        %v1615 = vrot.slane %v1440, 4
        %v1616 = vsel %vm240, %v1464, %v1615
        %v1618 = vunpack.c.l.s4 1983009808
        %v1619 = vunpack.c.0.s8 %v1618
        %v1620 = vperm.slane %v1614, %v1619
        %v1622 = vunpack.c.l.s4 1983009808
        %v1623 = vunpack.c.0.s8 %v1622
        %v1624 = vperm.slane %v1616, %v1623
        %v1625 = vrot.slane %v1596, 4
        %v1626 = vsel %vm240, %v1625, %v1584
        %v1627 = vrot.slane %v1584, 4
        %v1628 = vsel %vm240, %v1596, %v1627
        %v1630 = vunpack.c.l.s4 1934713408
        %v1631 = vunpack.c.0.s8 %v1630
        %v1632 = vperm.slane %v1626, %v1631
        %v1634 = vunpack.c.l.s4 1934713408
        %v1635 = vunpack.c.0.s8 %v1634
        %v1636 = vperm.slane %v1628, %v1635
        %v1637 = vrot.slane %v1600, 4
        %v1638 = vsel %vm240, %v1637, %v1588
        %v1639 = vrot.slane %v1588, 4
        %v1640 = vsel %vm240, %v1600, %v1639
        %v1642 = vunpack.c.l.s4 1934713408
        %v1643 = vunpack.c.0.s8 %v1642
        %v1644 = vperm.slane %v1638, %v1643
        %v1646 = vunpack.c.l.s4 1934713408
        %v1647 = vunpack.c.0.s8 %v1646
        %v1648 = vperm.slane %v1640, %v1647
        %v1649 = vrot.slane %v1620, 4
        %v1650 = vsel %vm240, %v1649, %v1608
        %v1651 = vrot.slane %v1608, 4
        %v1652 = vsel %vm240, %v1620, %v1651
        %v1654 = vunpack.c.l.s4 1934713408
        %v1655 = vunpack.c.0.s8 %v1654
        %v1656 = vperm.slane %v1650, %v1655
        %v1658 = vunpack.c.l.s4 1934713408
        %v1659 = vunpack.c.0.s8 %v1658
        %v1660 = vperm.slane %v1652, %v1659
        %v1661 = vrot.slane %v1624, 4
        %v1662 = vsel %vm240, %v1661, %v1612
        %v1663 = vrot.slane %v1612, 4
        %v1664 = vsel %vm240, %v1624, %v1663
        %v1666 = vunpack.c.l.s4 1934713408
        %v1667 = vunpack.c.0.s8 %v1666
        %v1668 = vperm.slane %v1662, %v1667
        %v1670 = vunpack.c.l.s4 1934713408
        %v1671 = vunpack.c.0.s8 %v1670
        %v1672 = vperm.slane %v1664, %v1671
        %v1673 = vrot.slane %v1656, 4
        %v1674 = vsel %vm240, %v1673, %v1632
        %v1675 = vrot.slane %v1632, 4
        %v1676 = vsel %vm240, %v1656, %v1675
        %v1677 = vrot.slane %v1660, 4
        %v1678 = vsel %vm240, %v1677, %v1636
        %v1679 = vrot.slane %v1636, 4
        %v1680 = vsel %vm240, %v1660, %v1679
        %v1681 = vrot.slane %v1668, 4
        %v1682 = vsel %vm240, %v1681, %v1644
        %v1683 = vrot.slane %v1644, 4
        %v1684 = vsel %vm240, %v1668, %v1683
        %v1685 = vrot.slane %v1672, 4
        %v1686 = vsel %vm240, %v1685, %v1648
        %v1687 = vrot.slane %v1648, 4
        %v1688 = vsel %vm240, %v1672, %v1687
        %1690 = vrot.lane.b32.xlu0 %v1564, 2
        %v1691 = vpop.permute.xlu0 %1690
        %1694 = vrot.lane.b32.xlu0 %v1566, 4
        %v1695 = vpop.permute.xlu0 %1694
        %1698 = vrot.lane.b32.xlu0 %v1568, 6
        %v1699 = vpop.permute.xlu0 %1698
        %1702 = vrot.lane.b32.xlu0 %v1570, 8
        %v1703 = vpop.permute.xlu0 %1702
        %1706 = vrot.lane.b32.xlu0 %v1572, 10
        %v1707 = vpop.permute.xlu0 %1706
        %1710 = vrot.lane.b32.xlu0 %v1574, 12
        %v1711 = vpop.permute.xlu0 %1710
        %1714 = vrot.lane.b32.xlu0 %v1576, 14
        %v1715 = vpop.permute.xlu0 %1714
        %1718 = vrot.lane.b32.xlu0 %v1674, 16
        %v1719 = vpop.permute.xlu0 %1718
        %1722 = vrot.lane.b32.xlu0 %v1676, 18
        %v1723 = vpop.permute.xlu0 %1722
        %1726 = vrot.lane.b32.xlu0 %v1678, 20
        %v1727 = vpop.permute.xlu0 %1726
        %1730 = vrot.lane.b32.xlu0 %v1680, 22
        %v1731 = vpop.permute.xlu0 %1730
        %1734 = vrot.lane.b32.xlu0 %v1682, 24
        %v1735 = vpop.permute.xlu0 %1734
        %1738 = vrot.lane.b32.xlu0 %v1684, 26
        %v1739 = vpop.permute.xlu0 %1738
        %1742 = vrot.lane.b32.xlu0 %v1686, 28
        %v1743 = vpop.permute.xlu0 %1742
        %1746 = vrot.lane.b32.xlu0 %v1688, 30
        %v1747 = vpop.permute.xlu0 %1746
        %v1749 = vsel %vm524, %v1562, %v1691
        %v1750 = vsel %vm526, %v1749, %v1695
        %v1751 = vsel %vm528, %v1750, %v1699
        %v1752 = vsel %vm530, %v1751, %v1703
        %v1753 = vsel %vm532, %v1752, %v1707
        %v1754 = vsel %vm534, %v1753, %v1711
        %v1755 = vsel %vm536, %v1754, %v1715
        %v1756 = vsel %vm538, %v1755, %v1719
        %v1757 = vsel %vm540, %v1756, %v1723
        %v1758 = vsel %vm542, %v1757, %v1727
        %v1759 = vsel %vm544, %v1758, %v1731
        %v1760 = vsel %vm546, %v1759, %v1735
        %v1761 = vsel %vm548, %v1760, %v1739
        %v1762 = vsel %vm550, %v1761, %v1743
        %v1763 = vsel %vm552, %v1762, %v1747
        %1765 = vrot.lane.b32.xlu0 %v1763, 64
        %v1766 = vpop.permute.xlu0 %1765
        %1768 = vst.msk [vmem:[%s133 + $0x8] sm:$0xff] %vm961, %v1766
        %1769 = vrot.lane.b32.xlu0 %v1763, 96
        %v1770 = vpop.permute.xlu0 %1769
        %1772 = vst.msk [vmem:[%s133 + $0x8] sm:$0xff] %vm966, %v1770
        %v1773 = vlaneseq
        %v1774 = vshrl.u32 %v1773, 7
        %v1775 = vadd.s32 %v1774, 64
        %1776 = vset.pattern.permute.xlu0 %v1775
        %1777 = vperm.xlu0 %1776, %v135
        %v1778 = vpop.permute.xlu0 %1777
        %v1779 = vlaneseq
        %v1780 = vshrl.u32 %v1779, 7
        %v1781 = vadd.s32 %v1780, 72
        %1782 = vset.pattern.permute.xlu0 %v1781
        %1783 = vperm.xlu0 %1782, %v135
        %v1784 = vpop.permute.xlu0 %1783
        %v1785 = vlaneseq
        %v1786 = vshrl.u32 %v1785, 7
        %v1787 = vadd.s32 %v1786, 64
        %1788 = vset.pattern.permute.xlu0 %v1787
        %1789 = vperm.xlu0 %1788, %v148
        %v1790 = vpop.permute.xlu0 %1789
        %v1791 = vlaneseq
        %v1792 = vshrl.u32 %v1791, 7
        %v1793 = vadd.s32 %v1792, 72
        %1794 = vset.pattern.permute.xlu0 %v1793
        %1795 = vperm.xlu0 %1794, %v148
        %v1796 = vpop.permute.xlu0 %1795
        %v1797 = vlaneseq
        %v1798 = vshrl.u32 %v1797, 7
        %v1799 = vadd.s32 %v1798, 64
        %1800 = vset.pattern.permute.xlu0 %v1799
        %1801 = vperm.xlu0 %1800, %v161
        %v1802 = vpop.permute.xlu0 %1801
        %v1803 = vlaneseq
        %v1804 = vshrl.u32 %v1803, 7
        %v1805 = vadd.s32 %v1804, 72
        %1806 = vset.pattern.permute.xlu0 %v1805
        %1807 = vperm.xlu0 %1806, %v161
        %v1808 = vpop.permute.xlu0 %1807
        %v1809 = vlaneseq
        %v1810 = vshrl.u32 %v1809, 7
        %v1811 = vadd.s32 %v1810, 64
        %1812 = vset.pattern.permute.xlu0 %v1811
        %1813 = vperm.xlu0 %1812, %v174
        %v1814 = vpop.permute.xlu0 %1813
        %v1815 = vlaneseq
        %v1816 = vshrl.u32 %v1815, 7
        %v1817 = vadd.s32 %v1816, 72
        %1818 = vset.pattern.permute.xlu0 %v1817
        %1819 = vperm.xlu0 %1818, %v174
        %v1820 = vpop.permute.xlu0 %1819
        %v1821 = vlaneseq
        %v1822 = vshrl.u32 %v1821, 7
        %v1823 = vadd.s32 %v1822, 64
        %1824 = vset.pattern.permute.xlu0 %v1823
        %1825 = vperm.xlu0 %1824, %v187
        %v1826 = vpop.permute.xlu0 %1825
        %v1827 = vlaneseq
        %v1828 = vshrl.u32 %v1827, 7
        %v1829 = vadd.s32 %v1828, 72
        %1830 = vset.pattern.permute.xlu0 %v1829
        %1831 = vperm.xlu0 %1830, %v187
        %v1832 = vpop.permute.xlu0 %1831
        %v1833 = vlaneseq
        %v1834 = vshrl.u32 %v1833, 7
        %v1835 = vadd.s32 %v1834, 64
        %1836 = vset.pattern.permute.xlu0 %v1835
        %1837 = vperm.xlu0 %1836, %v200
        %v1838 = vpop.permute.xlu0 %1837
        %v1839 = vlaneseq
        %v1840 = vshrl.u32 %v1839, 7
        %v1841 = vadd.s32 %v1840, 72
        %1842 = vset.pattern.permute.xlu0 %v1841
        %1843 = vperm.xlu0 %1842, %v200
        %v1844 = vpop.permute.xlu0 %1843
        %v1845 = vlaneseq
        %v1846 = vshrl.u32 %v1845, 7
        %v1847 = vadd.s32 %v1846, 64
        %1848 = vset.pattern.permute.xlu0 %v1847
        %1849 = vperm.xlu0 %1848, %v213
        %v1850 = vpop.permute.xlu0 %1849
        %v1851 = vlaneseq
        %v1852 = vshrl.u32 %v1851, 7
        %v1853 = vadd.s32 %v1852, 72
        %1854 = vset.pattern.permute.xlu0 %v1853
        %1855 = vperm.xlu0 %1854, %v213
        %v1856 = vpop.permute.xlu0 %1855
        %v1857 = vlaneseq
        %v1858 = vshrl.u32 %v1857, 7
        %v1859 = vadd.s32 %v1858, 64
        %1860 = vset.pattern.permute.xlu0 %v1859
        %1861 = vperm.xlu0 %1860, %v226
        %v1862 = vpop.permute.xlu0 %1861
        %v1863 = vlaneseq
        %v1864 = vshrl.u32 %v1863, 7
        %v1865 = vadd.s32 %v1864, 72
        %1866 = vset.pattern.permute.xlu0 %v1865
        %1867 = vperm.xlu0 %1866, %v226
        %v1868 = vpop.permute.xlu0 %1867
        %v1869 = vrot.slane %v1802, 4
        %v1870 = vsel %vm240, %v1869, %v1778
        %v1871 = vrot.slane %v1778, 4
        %v1872 = vsel %vm240, %v1802, %v1871
        %v1874 = vunpack.c.l.s4 1983009808
        %v1875 = vunpack.c.0.s8 %v1874
        %v1876 = vperm.slane %v1870, %v1875
        %v1878 = vunpack.c.l.s4 1983009808
        %v1879 = vunpack.c.0.s8 %v1878
        %v1880 = vperm.slane %v1872, %v1879
        %v1881 = vrot.slane %v1814, 4
        %v1882 = vsel %vm240, %v1881, %v1790
        %v1883 = vrot.slane %v1790, 4
        %v1884 = vsel %vm240, %v1814, %v1883
        %v1886 = vunpack.c.l.s4 1983009808
        %v1887 = vunpack.c.0.s8 %v1886
        %v1888 = vperm.slane %v1882, %v1887
        %v1890 = vunpack.c.l.s4 1983009808
        %v1891 = vunpack.c.0.s8 %v1890
        %v1892 = vperm.slane %v1884, %v1891
        %v1893 = vrot.slane %v1850, 4
        %v1894 = vsel %vm240, %v1893, %v1826
        %v1895 = vrot.slane %v1826, 4
        %v1896 = vsel %vm240, %v1850, %v1895
        %v1898 = vunpack.c.l.s4 1983009808
        %v1899 = vunpack.c.0.s8 %v1898
        %v1900 = vperm.slane %v1894, %v1899
        %v1902 = vunpack.c.l.s4 1983009808
        %v1903 = vunpack.c.0.s8 %v1902
        %v1904 = vperm.slane %v1896, %v1903
        %v1905 = vrot.slane %v1862, 4
        %v1906 = vsel %vm240, %v1905, %v1838
        %v1907 = vrot.slane %v1838, 4
        %v1908 = vsel %vm240, %v1862, %v1907
        %v1910 = vunpack.c.l.s4 1983009808
        %v1911 = vunpack.c.0.s8 %v1910
        %v1912 = vperm.slane %v1906, %v1911
        %v1914 = vunpack.c.l.s4 1983009808
        %v1915 = vunpack.c.0.s8 %v1914
        %v1916 = vperm.slane %v1908, %v1915
        %v1917 = vrot.slane %v1888, 4
        %v1918 = vsel %vm240, %v1917, %v1876
        %v1919 = vrot.slane %v1876, 4
        %v1920 = vsel %vm240, %v1888, %v1919
        %v1922 = vunpack.c.l.s4 1934713408
        %v1923 = vunpack.c.0.s8 %v1922
        %v1924 = vperm.slane %v1918, %v1923
        %v1926 = vunpack.c.l.s4 1934713408
        %v1927 = vunpack.c.0.s8 %v1926
        %v1928 = vperm.slane %v1920, %v1927
        %v1929 = vrot.slane %v1892, 4
        %v1930 = vsel %vm240, %v1929, %v1880
        %v1931 = vrot.slane %v1880, 4
        %v1932 = vsel %vm240, %v1892, %v1931
        %v1934 = vunpack.c.l.s4 1934713408
        %v1935 = vunpack.c.0.s8 %v1934
        %v1936 = vperm.slane %v1930, %v1935
        %v1938 = vunpack.c.l.s4 1934713408
        %v1939 = vunpack.c.0.s8 %v1938
        %v1940 = vperm.slane %v1932, %v1939
        %v1941 = vrot.slane %v1912, 4
        %v1942 = vsel %vm240, %v1941, %v1900
        %v1943 = vrot.slane %v1900, 4
        %v1944 = vsel %vm240, %v1912, %v1943
        %v1946 = vunpack.c.l.s4 1934713408
        %v1947 = vunpack.c.0.s8 %v1946
        %v1948 = vperm.slane %v1942, %v1947
        %v1950 = vunpack.c.l.s4 1934713408
        %v1951 = vunpack.c.0.s8 %v1950
        %v1952 = vperm.slane %v1944, %v1951
        %v1953 = vrot.slane %v1916, 4
        %v1954 = vsel %vm240, %v1953, %v1904
        %v1955 = vrot.slane %v1904, 4
        %v1956 = vsel %vm240, %v1916, %v1955
        %v1958 = vunpack.c.l.s4 1934713408
        %v1959 = vunpack.c.0.s8 %v1958
        %v1960 = vperm.slane %v1954, %v1959
        %v1962 = vunpack.c.l.s4 1934713408
        %v1963 = vunpack.c.0.s8 %v1962
        %v1964 = vperm.slane %v1956, %v1963
        %v1965 = vrot.slane %v1948, 4
        %v1966 = vsel %vm240, %v1965, %v1924
        %v1967 = vrot.slane %v1924, 4
        %v1968 = vsel %vm240, %v1948, %v1967
        %v1969 = vrot.slane %v1952, 4
        %v1970 = vsel %vm240, %v1969, %v1928
        %v1971 = vrot.slane %v1928, 4
        %v1972 = vsel %vm240, %v1952, %v1971
        %v1973 = vrot.slane %v1960, 4
        %v1974 = vsel %vm240, %v1973, %v1936
        %v1975 = vrot.slane %v1936, 4
        %v1976 = vsel %vm240, %v1960, %v1975
        %v1977 = vrot.slane %v1964, 4
        %v1978 = vsel %vm240, %v1977, %v1940
        %v1979 = vrot.slane %v1940, 4
        %v1980 = vsel %vm240, %v1964, %v1979
        %v1981 = vrot.slane %v1808, 4
        %v1982 = vsel %vm240, %v1981, %v1784
        %v1983 = vrot.slane %v1784, 4
        %v1984 = vsel %vm240, %v1808, %v1983
        %v1986 = vunpack.c.l.s4 1983009808
        %v1987 = vunpack.c.0.s8 %v1986
        %v1988 = vperm.slane %v1982, %v1987
        %v1990 = vunpack.c.l.s4 1983009808
        %v1991 = vunpack.c.0.s8 %v1990
        %v1992 = vperm.slane %v1984, %v1991
        %v1993 = vrot.slane %v1820, 4
        %v1994 = vsel %vm240, %v1993, %v1796
        %v1995 = vrot.slane %v1796, 4
        %v1996 = vsel %vm240, %v1820, %v1995
        %v1998 = vunpack.c.l.s4 1983009808
        %v1999 = vunpack.c.0.s8 %v1998
        %v2000 = vperm.slane %v1994, %v1999
        %v2002 = vunpack.c.l.s4 1983009808
        %v2003 = vunpack.c.0.s8 %v2002
        %v2004 = vperm.slane %v1996, %v2003
        %v2005 = vrot.slane %v1856, 4
        %v2006 = vsel %vm240, %v2005, %v1832
        %v2007 = vrot.slane %v1832, 4
        %v2008 = vsel %vm240, %v1856, %v2007
        %v2010 = vunpack.c.l.s4 1983009808
        %v2011 = vunpack.c.0.s8 %v2010
        %v2012 = vperm.slane %v2006, %v2011
        %v2014 = vunpack.c.l.s4 1983009808
        %v2015 = vunpack.c.0.s8 %v2014
        %v2016 = vperm.slane %v2008, %v2015
        %v2017 = vrot.slane %v1868, 4
        %v2018 = vsel %vm240, %v2017, %v1844
        %v2019 = vrot.slane %v1844, 4
        %v2020 = vsel %vm240, %v1868, %v2019
        %v2022 = vunpack.c.l.s4 1983009808
        %v2023 = vunpack.c.0.s8 %v2022
        %v2024 = vperm.slane %v2018, %v2023
        %v2026 = vunpack.c.l.s4 1983009808
        %v2027 = vunpack.c.0.s8 %v2026
        %v2028 = vperm.slane %v2020, %v2027
        %v2029 = vrot.slane %v2000, 4
        %v2030 = vsel %vm240, %v2029, %v1988
        %v2031 = vrot.slane %v1988, 4
        %v2032 = vsel %vm240, %v2000, %v2031
        %v2034 = vunpack.c.l.s4 1934713408
        %v2035 = vunpack.c.0.s8 %v2034
        %v2036 = vperm.slane %v2030, %v2035
        %v2038 = vunpack.c.l.s4 1934713408
        %v2039 = vunpack.c.0.s8 %v2038
        %v2040 = vperm.slane %v2032, %v2039
        %v2041 = vrot.slane %v2004, 4
        %v2042 = vsel %vm240, %v2041, %v1992
        %v2043 = vrot.slane %v1992, 4
        %v2044 = vsel %vm240, %v2004, %v2043
        %v2046 = vunpack.c.l.s4 1934713408
        %v2047 = vunpack.c.0.s8 %v2046
        %v2048 = vperm.slane %v2042, %v2047
        %v2050 = vunpack.c.l.s4 1934713408
        %v2051 = vunpack.c.0.s8 %v2050
        %v2052 = vperm.slane %v2044, %v2051
        %v2053 = vrot.slane %v2024, 4
        %v2054 = vsel %vm240, %v2053, %v2012
        %v2055 = vrot.slane %v2012, 4
        %v2056 = vsel %vm240, %v2024, %v2055
        %v2058 = vunpack.c.l.s4 1934713408
        %v2059 = vunpack.c.0.s8 %v2058
        %v2060 = vperm.slane %v2054, %v2059
        %v2062 = vunpack.c.l.s4 1934713408
        %v2063 = vunpack.c.0.s8 %v2062
        %v2064 = vperm.slane %v2056, %v2063
        %v2065 = vrot.slane %v2028, 4
        %v2066 = vsel %vm240, %v2065, %v2016
        %v2067 = vrot.slane %v2016, 4
        %v2068 = vsel %vm240, %v2028, %v2067
        %v2070 = vunpack.c.l.s4 1934713408
        %v2071 = vunpack.c.0.s8 %v2070
        %v2072 = vperm.slane %v2066, %v2071
        %v2074 = vunpack.c.l.s4 1934713408
        %v2075 = vunpack.c.0.s8 %v2074
        %v2076 = vperm.slane %v2068, %v2075
        %v2077 = vrot.slane %v2060, 4
        %v2078 = vsel %vm240, %v2077, %v2036
        %v2079 = vrot.slane %v2036, 4
        %v2080 = vsel %vm240, %v2060, %v2079
        %v2081 = vrot.slane %v2064, 4
        %v2082 = vsel %vm240, %v2081, %v2040
        %v2083 = vrot.slane %v2040, 4
        %v2084 = vsel %vm240, %v2064, %v2083
        %v2085 = vrot.slane %v2072, 4
        %v2086 = vsel %vm240, %v2085, %v2048
        %v2087 = vrot.slane %v2048, 4
        %v2088 = vsel %vm240, %v2072, %v2087
        %v2089 = vrot.slane %v2076, 4
        %v2090 = vsel %vm240, %v2089, %v2052
        %v2091 = vrot.slane %v2052, 4
        %v2092 = vsel %vm240, %v2076, %v2091
        %2094 = vrot.lane.b32.xlu0 %v1968, 2
        %v2095 = vpop.permute.xlu0 %2094
        %2098 = vrot.lane.b32.xlu0 %v1970, 4
        %v2099 = vpop.permute.xlu0 %2098
        %2102 = vrot.lane.b32.xlu0 %v1972, 6
        %v2103 = vpop.permute.xlu0 %2102
        %2106 = vrot.lane.b32.xlu0 %v1974, 8
        %v2107 = vpop.permute.xlu0 %2106
        %2110 = vrot.lane.b32.xlu0 %v1976, 10
        %v2111 = vpop.permute.xlu0 %2110
        %2114 = vrot.lane.b32.xlu0 %v1978, 12
        %v2115 = vpop.permute.xlu0 %2114
        %2118 = vrot.lane.b32.xlu0 %v1980, 14
        %v2119 = vpop.permute.xlu0 %2118
        %2122 = vrot.lane.b32.xlu0 %v2078, 16
        %v2123 = vpop.permute.xlu0 %2122
        %2126 = vrot.lane.b32.xlu0 %v2080, 18
        %v2127 = vpop.permute.xlu0 %2126
        %2130 = vrot.lane.b32.xlu0 %v2082, 20
        %v2131 = vpop.permute.xlu0 %2130
        %2134 = vrot.lane.b32.xlu0 %v2084, 22
        %v2135 = vpop.permute.xlu0 %2134
        %2138 = vrot.lane.b32.xlu0 %v2086, 24
        %v2139 = vpop.permute.xlu0 %2138
        %2142 = vrot.lane.b32.xlu0 %v2088, 26
        %v2143 = vpop.permute.xlu0 %2142
        %2146 = vrot.lane.b32.xlu0 %v2090, 28
        %v2147 = vpop.permute.xlu0 %2146
        %2150 = vrot.lane.b32.xlu0 %v2092, 30
        %v2151 = vpop.permute.xlu0 %2150
        %v2153 = vsel %vm524, %v1966, %v2095
        %v2154 = vsel %vm526, %v2153, %v2099
        %v2155 = vsel %vm528, %v2154, %v2103
        %v2156 = vsel %vm530, %v2155, %v2107
        %v2157 = vsel %vm532, %v2156, %v2111
        %v2158 = vsel %vm534, %v2157, %v2115
        %v2159 = vsel %vm536, %v2158, %v2119
        %v2160 = vsel %vm538, %v2159, %v2123
        %v2161 = vsel %vm540, %v2160, %v2127
        %v2162 = vsel %vm542, %v2161, %v2131
        %v2163 = vsel %vm544, %v2162, %v2135
        %v2164 = vsel %vm546, %v2163, %v2139
        %v2165 = vsel %vm548, %v2164, %v2143
        %v2166 = vsel %vm550, %v2165, %v2147
        %v2167 = vsel %vm552, %v2166, %v2151
        %2168 = vst.msk [vmem:[%s133 + $0x10] sm:$0xff] %vm554, %v2167
        %2170 = vrot.lane.b32.xlu0 %v2167, 32
        %v2171 = vpop.permute.xlu0 %2170
        %2173 = vst.msk [vmem:[%s133 + $0x10] sm:$0xff] %vm560, %v2171
        %v2174 = vlaneseq
        %v2175 = vshrl.u32 %v2174, 7
        %v2176 = vadd.s32 %v2175, 80
        %2177 = vset.pattern.permute.xlu0 %v2176
        %2178 = vperm.xlu0 %2177, %v135
        %v2179 = vpop.permute.xlu0 %2178
        %v2180 = vlaneseq
        %v2181 = vshrl.u32 %v2180, 7
        %v2182 = vadd.s32 %v2181, 88
        %2183 = vset.pattern.permute.xlu0 %v2182
        %2184 = vperm.xlu0 %2183, %v135
        %v2185 = vpop.permute.xlu0 %2184
        %v2186 = vlaneseq
        %v2187 = vshrl.u32 %v2186, 7
        %v2188 = vadd.s32 %v2187, 80
        %2189 = vset.pattern.permute.xlu0 %v2188
        %2190 = vperm.xlu0 %2189, %v148
        %v2191 = vpop.permute.xlu0 %2190
        %v2192 = vlaneseq
        %v2193 = vshrl.u32 %v2192, 7
        %v2194 = vadd.s32 %v2193, 88
        %2195 = vset.pattern.permute.xlu0 %v2194
        %2196 = vperm.xlu0 %2195, %v148
        %v2197 = vpop.permute.xlu0 %2196
        %v2198 = vlaneseq
        %v2199 = vshrl.u32 %v2198, 7
        %v2200 = vadd.s32 %v2199, 80
        %2201 = vset.pattern.permute.xlu0 %v2200
        %2202 = vperm.xlu0 %2201, %v161
        %v2203 = vpop.permute.xlu0 %2202
        %v2204 = vlaneseq
        %v2205 = vshrl.u32 %v2204, 7
        %v2206 = vadd.s32 %v2205, 88
        %2207 = vset.pattern.permute.xlu0 %v2206
        %2208 = vperm.xlu0 %2207, %v161
        %v2209 = vpop.permute.xlu0 %2208
        %v2210 = vlaneseq
        %v2211 = vshrl.u32 %v2210, 7
        %v2212 = vadd.s32 %v2211, 80
        %2213 = vset.pattern.permute.xlu0 %v2212
        %2214 = vperm.xlu0 %2213, %v174
        %v2215 = vpop.permute.xlu0 %2214
        %v2216 = vlaneseq
        %v2217 = vshrl.u32 %v2216, 7
        %v2218 = vadd.s32 %v2217, 88
        %2219 = vset.pattern.permute.xlu0 %v2218
        %2220 = vperm.xlu0 %2219, %v174
        %v2221 = vpop.permute.xlu0 %2220
        %v2222 = vlaneseq
        %v2223 = vshrl.u32 %v2222, 7
        %v2224 = vadd.s32 %v2223, 80
        %2225 = vset.pattern.permute.xlu0 %v2224
        %2226 = vperm.xlu0 %2225, %v187
        %v2227 = vpop.permute.xlu0 %2226
        %v2228 = vlaneseq
        %v2229 = vshrl.u32 %v2228, 7
        %v2230 = vadd.s32 %v2229, 88
        %2231 = vset.pattern.permute.xlu0 %v2230
        %2232 = vperm.xlu0 %2231, %v187
        %v2233 = vpop.permute.xlu0 %2232
        %v2234 = vlaneseq
        %v2235 = vshrl.u32 %v2234, 7
        %v2236 = vadd.s32 %v2235, 80
        %2237 = vset.pattern.permute.xlu0 %v2236
        %2238 = vperm.xlu0 %2237, %v200
        %v2239 = vpop.permute.xlu0 %2238
        %v2240 = vlaneseq
        %v2241 = vshrl.u32 %v2240, 7
        %v2242 = vadd.s32 %v2241, 88
        %2243 = vset.pattern.permute.xlu0 %v2242
        %2244 = vperm.xlu0 %2243, %v200
        %v2245 = vpop.permute.xlu0 %2244
        %v2246 = vlaneseq
        %v2247 = vshrl.u32 %v2246, 7
        %v2248 = vadd.s32 %v2247, 80
        %2249 = vset.pattern.permute.xlu0 %v2248
        %2250 = vperm.xlu0 %2249, %v213
        %v2251 = vpop.permute.xlu0 %2250
        %v2252 = vlaneseq
        %v2253 = vshrl.u32 %v2252, 7
        %v2254 = vadd.s32 %v2253, 88
        %2255 = vset.pattern.permute.xlu0 %v2254
        %2256 = vperm.xlu0 %2255, %v213
        %v2257 = vpop.permute.xlu0 %2256
        %v2258 = vlaneseq
        %v2259 = vshrl.u32 %v2258, 7
        %v2260 = vadd.s32 %v2259, 80
        %2261 = vset.pattern.permute.xlu0 %v2260
        %2262 = vperm.xlu0 %2261, %v226
        %v2263 = vpop.permute.xlu0 %2262
        %v2264 = vlaneseq
        %v2265 = vshrl.u32 %v2264, 7
        %v2266 = vadd.s32 %v2265, 88
        %2267 = vset.pattern.permute.xlu0 %v2266
        %2268 = vperm.xlu0 %2267, %v226
        %v2269 = vpop.permute.xlu0 %2268
        %v2270 = vrot.slane %v2203, 4
        %v2271 = vsel %vm240, %v2270, %v2179
        %v2272 = vrot.slane %v2179, 4
        %v2273 = vsel %vm240, %v2203, %v2272
        %v2275 = vunpack.c.l.s4 1983009808
        %v2276 = vunpack.c.0.s8 %v2275
        %v2277 = vperm.slane %v2271, %v2276
        %v2279 = vunpack.c.l.s4 1983009808
        %v2280 = vunpack.c.0.s8 %v2279
        %v2281 = vperm.slane %v2273, %v2280
        %v2282 = vrot.slane %v2215, 4
        %v2283 = vsel %vm240, %v2282, %v2191
        %v2284 = vrot.slane %v2191, 4
        %v2285 = vsel %vm240, %v2215, %v2284
        %v2287 = vunpack.c.l.s4 1983009808
        %v2288 = vunpack.c.0.s8 %v2287
        %v2289 = vperm.slane %v2283, %v2288
        %v2291 = vunpack.c.l.s4 1983009808
        %v2292 = vunpack.c.0.s8 %v2291
        %v2293 = vperm.slane %v2285, %v2292
        %v2294 = vrot.slane %v2251, 4
        %v2295 = vsel %vm240, %v2294, %v2227
        %v2296 = vrot.slane %v2227, 4
        %v2297 = vsel %vm240, %v2251, %v2296
        %v2299 = vunpack.c.l.s4 1983009808
        %v2300 = vunpack.c.0.s8 %v2299
        %v2301 = vperm.slane %v2295, %v2300
        %v2303 = vunpack.c.l.s4 1983009808
        %v2304 = vunpack.c.0.s8 %v2303
        %v2305 = vperm.slane %v2297, %v2304
        %v2306 = vrot.slane %v2263, 4
        %v2307 = vsel %vm240, %v2306, %v2239
        %v2308 = vrot.slane %v2239, 4
        %v2309 = vsel %vm240, %v2263, %v2308
        %v2311 = vunpack.c.l.s4 1983009808
        %v2312 = vunpack.c.0.s8 %v2311
        %v2313 = vperm.slane %v2307, %v2312
        %v2315 = vunpack.c.l.s4 1983009808
        %v2316 = vunpack.c.0.s8 %v2315
        %v2317 = vperm.slane %v2309, %v2316
        %v2318 = vrot.slane %v2289, 4
        %v2319 = vsel %vm240, %v2318, %v2277
        %v2320 = vrot.slane %v2277, 4
        %v2321 = vsel %vm240, %v2289, %v2320
        %v2323 = vunpack.c.l.s4 1934713408
        %v2324 = vunpack.c.0.s8 %v2323
        %v2325 = vperm.slane %v2319, %v2324
        %v2327 = vunpack.c.l.s4 1934713408
        %v2328 = vunpack.c.0.s8 %v2327
        %v2329 = vperm.slane %v2321, %v2328
        %v2330 = vrot.slane %v2293, 4
        %v2331 = vsel %vm240, %v2330, %v2281
        %v2332 = vrot.slane %v2281, 4
        %v2333 = vsel %vm240, %v2293, %v2332
        %v2335 = vunpack.c.l.s4 1934713408
        %v2336 = vunpack.c.0.s8 %v2335
        %v2337 = vperm.slane %v2331, %v2336
        %v2339 = vunpack.c.l.s4 1934713408
        %v2340 = vunpack.c.0.s8 %v2339
        %v2341 = vperm.slane %v2333, %v2340
        %v2342 = vrot.slane %v2313, 4
        %v2343 = vsel %vm240, %v2342, %v2301
        %v2344 = vrot.slane %v2301, 4
        %v2345 = vsel %vm240, %v2313, %v2344
        %v2347 = vunpack.c.l.s4 1934713408
        %v2348 = vunpack.c.0.s8 %v2347
        %v2349 = vperm.slane %v2343, %v2348
        %v2351 = vunpack.c.l.s4 1934713408
        %v2352 = vunpack.c.0.s8 %v2351
        %v2353 = vperm.slane %v2345, %v2352
        %v2354 = vrot.slane %v2317, 4
        %v2355 = vsel %vm240, %v2354, %v2305
        %v2356 = vrot.slane %v2305, 4
        %v2357 = vsel %vm240, %v2317, %v2356
        %v2359 = vunpack.c.l.s4 1934713408
        %v2360 = vunpack.c.0.s8 %v2359
        %v2361 = vperm.slane %v2355, %v2360
        %v2363 = vunpack.c.l.s4 1934713408
        %v2364 = vunpack.c.0.s8 %v2363
        %v2365 = vperm.slane %v2357, %v2364
        %v2366 = vrot.slane %v2349, 4
        %v2367 = vsel %vm240, %v2366, %v2325
        %v2368 = vrot.slane %v2325, 4
        %v2369 = vsel %vm240, %v2349, %v2368
        %v2370 = vrot.slane %v2353, 4
        %v2371 = vsel %vm240, %v2370, %v2329
        %v2372 = vrot.slane %v2329, 4
        %v2373 = vsel %vm240, %v2353, %v2372
        %v2374 = vrot.slane %v2361, 4
        %v2375 = vsel %vm240, %v2374, %v2337
        %v2376 = vrot.slane %v2337, 4
        %v2377 = vsel %vm240, %v2361, %v2376
        %v2378 = vrot.slane %v2365, 4
        %v2379 = vsel %vm240, %v2378, %v2341
        %v2380 = vrot.slane %v2341, 4
        %v2381 = vsel %vm240, %v2365, %v2380
        %v2382 = vrot.slane %v2209, 4
        %v2383 = vsel %vm240, %v2382, %v2185
        %v2384 = vrot.slane %v2185, 4
        %v2385 = vsel %vm240, %v2209, %v2384
        %v2387 = vunpack.c.l.s4 1983009808
        %v2388 = vunpack.c.0.s8 %v2387
        %v2389 = vperm.slane %v2383, %v2388
        %v2391 = vunpack.c.l.s4 1983009808
        %v2392 = vunpack.c.0.s8 %v2391
        %v2393 = vperm.slane %v2385, %v2392
        %v2394 = vrot.slane %v2221, 4
        %v2395 = vsel %vm240, %v2394, %v2197
        %v2396 = vrot.slane %v2197, 4
        %v2397 = vsel %vm240, %v2221, %v2396
        %v2399 = vunpack.c.l.s4 1983009808
        %v2400 = vunpack.c.0.s8 %v2399
        %v2401 = vperm.slane %v2395, %v2400
        %v2403 = vunpack.c.l.s4 1983009808
        %v2404 = vunpack.c.0.s8 %v2403
        %v2405 = vperm.slane %v2397, %v2404
        %v2406 = vrot.slane %v2257, 4
        %v2407 = vsel %vm240, %v2406, %v2233
        %v2408 = vrot.slane %v2233, 4
        %v2409 = vsel %vm240, %v2257, %v2408
        %v2411 = vunpack.c.l.s4 1983009808
        %v2412 = vunpack.c.0.s8 %v2411
        %v2413 = vperm.slane %v2407, %v2412
        %v2415 = vunpack.c.l.s4 1983009808
        %v2416 = vunpack.c.0.s8 %v2415
        %v2417 = vperm.slane %v2409, %v2416
        %v2418 = vrot.slane %v2269, 4
        %v2419 = vsel %vm240, %v2418, %v2245
        %v2420 = vrot.slane %v2245, 4
        %v2421 = vsel %vm240, %v2269, %v2420
        %v2423 = vunpack.c.l.s4 1983009808
        %v2424 = vunpack.c.0.s8 %v2423
        %v2425 = vperm.slane %v2419, %v2424
        %v2427 = vunpack.c.l.s4 1983009808
        %v2428 = vunpack.c.0.s8 %v2427
        %v2429 = vperm.slane %v2421, %v2428
        %v2430 = vrot.slane %v2401, 4
        %v2431 = vsel %vm240, %v2430, %v2389
        %v2432 = vrot.slane %v2389, 4
        %v2433 = vsel %vm240, %v2401, %v2432
        %v2435 = vunpack.c.l.s4 1934713408
        %v2436 = vunpack.c.0.s8 %v2435
        %v2437 = vperm.slane %v2431, %v2436
        %v2439 = vunpack.c.l.s4 1934713408
        %v2440 = vunpack.c.0.s8 %v2439
        %v2441 = vperm.slane %v2433, %v2440
        %v2442 = vrot.slane %v2405, 4
        %v2443 = vsel %vm240, %v2442, %v2393
        %v2444 = vrot.slane %v2393, 4
        %v2445 = vsel %vm240, %v2405, %v2444
        %v2447 = vunpack.c.l.s4 1934713408
        %v2448 = vunpack.c.0.s8 %v2447
        %v2449 = vperm.slane %v2443, %v2448
        %v2451 = vunpack.c.l.s4 1934713408
        %v2452 = vunpack.c.0.s8 %v2451
        %v2453 = vperm.slane %v2445, %v2452
        %v2454 = vrot.slane %v2425, 4
        %v2455 = vsel %vm240, %v2454, %v2413
        %v2456 = vrot.slane %v2413, 4
        %v2457 = vsel %vm240, %v2425, %v2456
        %v2459 = vunpack.c.l.s4 1934713408
        %v2460 = vunpack.c.0.s8 %v2459
        %v2461 = vperm.slane %v2455, %v2460
        %v2463 = vunpack.c.l.s4 1934713408
        %v2464 = vunpack.c.0.s8 %v2463
        %v2465 = vperm.slane %v2457, %v2464
        %v2466 = vrot.slane %v2429, 4
        %v2467 = vsel %vm240, %v2466, %v2417
        %v2468 = vrot.slane %v2417, 4
        %v2469 = vsel %vm240, %v2429, %v2468
        %v2471 = vunpack.c.l.s4 1934713408
        %v2472 = vunpack.c.0.s8 %v2471
        %v2473 = vperm.slane %v2467, %v2472
        %v2475 = vunpack.c.l.s4 1934713408
        %v2476 = vunpack.c.0.s8 %v2475
        %v2477 = vperm.slane %v2469, %v2476
        %v2478 = vrot.slane %v2461, 4
        %v2479 = vsel %vm240, %v2478, %v2437
        %v2480 = vrot.slane %v2437, 4
        %v2481 = vsel %vm240, %v2461, %v2480
        %v2482 = vrot.slane %v2465, 4
        %v2483 = vsel %vm240, %v2482, %v2441
        %v2484 = vrot.slane %v2441, 4
        %v2485 = vsel %vm240, %v2465, %v2484
        %v2486 = vrot.slane %v2473, 4
        %v2487 = vsel %vm240, %v2486, %v2449
        %v2488 = vrot.slane %v2449, 4
        %v2489 = vsel %vm240, %v2473, %v2488
        %v2490 = vrot.slane %v2477, 4
        %v2491 = vsel %vm240, %v2490, %v2453
        %v2492 = vrot.slane %v2453, 4
        %v2493 = vsel %vm240, %v2477, %v2492
        %2495 = vrot.lane.b32.xlu0 %v2369, 2
        %v2496 = vpop.permute.xlu0 %2495
        %2499 = vrot.lane.b32.xlu0 %v2371, 4
        %v2500 = vpop.permute.xlu0 %2499
        %2503 = vrot.lane.b32.xlu0 %v2373, 6
        %v2504 = vpop.permute.xlu0 %2503
        %2507 = vrot.lane.b32.xlu0 %v2375, 8
        %v2508 = vpop.permute.xlu0 %2507
        %2511 = vrot.lane.b32.xlu0 %v2377, 10
        %v2512 = vpop.permute.xlu0 %2511
        %2515 = vrot.lane.b32.xlu0 %v2379, 12
        %v2516 = vpop.permute.xlu0 %2515
        %2519 = vrot.lane.b32.xlu0 %v2381, 14
        %v2520 = vpop.permute.xlu0 %2519
        %2523 = vrot.lane.b32.xlu0 %v2479, 16
        %v2524 = vpop.permute.xlu0 %2523
        %2527 = vrot.lane.b32.xlu0 %v2481, 18
        %v2528 = vpop.permute.xlu0 %2527
        %2531 = vrot.lane.b32.xlu0 %v2483, 20
        %v2532 = vpop.permute.xlu0 %2531
        %2535 = vrot.lane.b32.xlu0 %v2485, 22
        %v2536 = vpop.permute.xlu0 %2535
        %2539 = vrot.lane.b32.xlu0 %v2487, 24
        %v2540 = vpop.permute.xlu0 %2539
        %2543 = vrot.lane.b32.xlu0 %v2489, 26
        %v2544 = vpop.permute.xlu0 %2543
        %2547 = vrot.lane.b32.xlu0 %v2491, 28
        %v2548 = vpop.permute.xlu0 %2547
        %2551 = vrot.lane.b32.xlu0 %v2493, 30
        %v2552 = vpop.permute.xlu0 %2551
        %v2554 = vsel %vm524, %v2367, %v2496
        %v2555 = vsel %vm526, %v2554, %v2500
        %v2556 = vsel %vm528, %v2555, %v2504
        %v2557 = vsel %vm530, %v2556, %v2508
        %v2558 = vsel %vm532, %v2557, %v2512
        %v2559 = vsel %vm534, %v2558, %v2516
        %v2560 = vsel %vm536, %v2559, %v2520
        %v2561 = vsel %vm538, %v2560, %v2524
        %v2562 = vsel %vm540, %v2561, %v2528
        %v2563 = vsel %vm542, %v2562, %v2532
        %v2564 = vsel %vm544, %v2563, %v2536
        %v2565 = vsel %vm546, %v2564, %v2540
        %v2566 = vsel %vm548, %v2565, %v2544
        %v2567 = vsel %vm550, %v2566, %v2548
        %v2568 = vsel %vm552, %v2567, %v2552
        %2570 = vrot.lane.b32.xlu0 %v2568, 64
        %v2571 = vpop.permute.xlu0 %2570
        %2573 = vst.msk [vmem:[%s133 + $0x10] sm:$0xff] %vm961, %v2571
        %2574 = vrot.lane.b32.xlu0 %v2568, 96
        %v2575 = vpop.permute.xlu0 %2574
        %2577 = vst.msk [vmem:[%s133 + $0x10] sm:$0xff] %vm966, %v2575
        %v2578 = vlaneseq
        %v2579 = vshrl.u32 %v2578, 7
        %v2580 = vadd.s32 %v2579, 96
        %2581 = vset.pattern.permute.xlu0 %v2580
        %2582 = vperm.xlu0 %2581, %v135
        %v2583 = vpop.permute.xlu0 %2582
        %v2584 = vlaneseq
        %v2585 = vshrl.u32 %v2584, 7
        %v2586 = vadd.s32 %v2585, 104
        %2587 = vset.pattern.permute.xlu0 %v2586
        %2588 = vperm.xlu0 %2587, %v135
        %v2589 = vpop.permute.xlu0 %2588
        %v2590 = vlaneseq
        %v2591 = vshrl.u32 %v2590, 7
        %v2592 = vadd.s32 %v2591, 96
        %2593 = vset.pattern.permute.xlu0 %v2592
        %2594 = vperm.xlu0 %2593, %v148
        %v2595 = vpop.permute.xlu0 %2594
        %v2596 = vlaneseq
        %v2597 = vshrl.u32 %v2596, 7
        %v2598 = vadd.s32 %v2597, 104
        %2599 = vset.pattern.permute.xlu0 %v2598
        %2600 = vperm.xlu0 %2599, %v148
        %v2601 = vpop.permute.xlu0 %2600
        %v2602 = vlaneseq
        %v2603 = vshrl.u32 %v2602, 7
        %v2604 = vadd.s32 %v2603, 96
        %2605 = vset.pattern.permute.xlu0 %v2604
        %2606 = vperm.xlu0 %2605, %v161
        %v2607 = vpop.permute.xlu0 %2606
        %v2608 = vlaneseq
        %v2609 = vshrl.u32 %v2608, 7
        %v2610 = vadd.s32 %v2609, 104
        %2611 = vset.pattern.permute.xlu0 %v2610
        %2612 = vperm.xlu0 %2611, %v161
        %v2613 = vpop.permute.xlu0 %2612
        %v2614 = vlaneseq
        %v2615 = vshrl.u32 %v2614, 7
        %v2616 = vadd.s32 %v2615, 96
        %2617 = vset.pattern.permute.xlu0 %v2616
        %2618 = vperm.xlu0 %2617, %v174
        %v2619 = vpop.permute.xlu0 %2618
        %v2620 = vlaneseq
        %v2621 = vshrl.u32 %v2620, 7
        %v2622 = vadd.s32 %v2621, 104
        %2623 = vset.pattern.permute.xlu0 %v2622
        %2624 = vperm.xlu0 %2623, %v174
        %v2625 = vpop.permute.xlu0 %2624
        %v2626 = vlaneseq
        %v2627 = vshrl.u32 %v2626, 7
        %v2628 = vadd.s32 %v2627, 96
        %2629 = vset.pattern.permute.xlu0 %v2628
        %2630 = vperm.xlu0 %2629, %v187
        %v2631 = vpop.permute.xlu0 %2630
        %v2632 = vlaneseq
        %v2633 = vshrl.u32 %v2632, 7
        %v2634 = vadd.s32 %v2633, 104
        %2635 = vset.pattern.permute.xlu0 %v2634
        %2636 = vperm.xlu0 %2635, %v187
        %v2637 = vpop.permute.xlu0 %2636
        %v2638 = vlaneseq
        %v2639 = vshrl.u32 %v2638, 7
        %v2640 = vadd.s32 %v2639, 96
        %2641 = vset.pattern.permute.xlu0 %v2640
        %2642 = vperm.xlu0 %2641, %v200
        %v2643 = vpop.permute.xlu0 %2642
        %v2644 = vlaneseq
        %v2645 = vshrl.u32 %v2644, 7
        %v2646 = vadd.s32 %v2645, 104
        %2647 = vset.pattern.permute.xlu0 %v2646
        %2648 = vperm.xlu0 %2647, %v200
        %v2649 = vpop.permute.xlu0 %2648
        %v2650 = vlaneseq
        %v2651 = vshrl.u32 %v2650, 7
        %v2652 = vadd.s32 %v2651, 96
        %2653 = vset.pattern.permute.xlu0 %v2652
        %2654 = vperm.xlu0 %2653, %v213
        %v2655 = vpop.permute.xlu0 %2654
        %v2656 = vlaneseq
        %v2657 = vshrl.u32 %v2656, 7
        %v2658 = vadd.s32 %v2657, 104
        %2659 = vset.pattern.permute.xlu0 %v2658
        %2660 = vperm.xlu0 %2659, %v213
        %v2661 = vpop.permute.xlu0 %2660
        %v2662 = vlaneseq
        %v2663 = vshrl.u32 %v2662, 7
        %v2664 = vadd.s32 %v2663, 96
        %2665 = vset.pattern.permute.xlu0 %v2664
        %2666 = vperm.xlu0 %2665, %v226
        %v2667 = vpop.permute.xlu0 %2666
        %v2668 = vlaneseq
        %v2669 = vshrl.u32 %v2668, 7
        %v2670 = vadd.s32 %v2669, 104
        %2671 = vset.pattern.permute.xlu0 %v2670
        %2672 = vperm.xlu0 %2671, %v226
        %v2673 = vpop.permute.xlu0 %2672
        %v2674 = vrot.slane %v2607, 4
        %v2675 = vsel %vm240, %v2674, %v2583
        %v2676 = vrot.slane %v2583, 4
        %v2677 = vsel %vm240, %v2607, %v2676
        %v2679 = vunpack.c.l.s4 1983009808
        %v2680 = vunpack.c.0.s8 %v2679
        %v2681 = vperm.slane %v2675, %v2680
        %v2683 = vunpack.c.l.s4 1983009808
        %v2684 = vunpack.c.0.s8 %v2683
        %v2685 = vperm.slane %v2677, %v2684
        %v2686 = vrot.slane %v2619, 4
        %v2687 = vsel %vm240, %v2686, %v2595
        %v2688 = vrot.slane %v2595, 4
        %v2689 = vsel %vm240, %v2619, %v2688
        %v2691 = vunpack.c.l.s4 1983009808
        %v2692 = vunpack.c.0.s8 %v2691
        %v2693 = vperm.slane %v2687, %v2692
        %v2695 = vunpack.c.l.s4 1983009808
        %v2696 = vunpack.c.0.s8 %v2695
        %v2697 = vperm.slane %v2689, %v2696
        %v2698 = vrot.slane %v2655, 4
        %v2699 = vsel %vm240, %v2698, %v2631
        %v2700 = vrot.slane %v2631, 4
        %v2701 = vsel %vm240, %v2655, %v2700
        %v2703 = vunpack.c.l.s4 1983009808
        %v2704 = vunpack.c.0.s8 %v2703
        %v2705 = vperm.slane %v2699, %v2704
        %v2707 = vunpack.c.l.s4 1983009808
        %v2708 = vunpack.c.0.s8 %v2707
        %v2709 = vperm.slane %v2701, %v2708
        %v2710 = vrot.slane %v2667, 4
        %v2711 = vsel %vm240, %v2710, %v2643
        %v2712 = vrot.slane %v2643, 4
        %v2713 = vsel %vm240, %v2667, %v2712
        %v2715 = vunpack.c.l.s4 1983009808
        %v2716 = vunpack.c.0.s8 %v2715
        %v2717 = vperm.slane %v2711, %v2716
        %v2719 = vunpack.c.l.s4 1983009808
        %v2720 = vunpack.c.0.s8 %v2719
        %v2721 = vperm.slane %v2713, %v2720
        %v2722 = vrot.slane %v2693, 4
        %v2723 = vsel %vm240, %v2722, %v2681
        %v2724 = vrot.slane %v2681, 4
        %v2725 = vsel %vm240, %v2693, %v2724
        %v2727 = vunpack.c.l.s4 1934713408
        %v2728 = vunpack.c.0.s8 %v2727
        %v2729 = vperm.slane %v2723, %v2728
        %v2731 = vunpack.c.l.s4 1934713408
        %v2732 = vunpack.c.0.s8 %v2731
        %v2733 = vperm.slane %v2725, %v2732
        %v2734 = vrot.slane %v2697, 4
        %v2735 = vsel %vm240, %v2734, %v2685
        %v2736 = vrot.slane %v2685, 4
        %v2737 = vsel %vm240, %v2697, %v2736
        %v2739 = vunpack.c.l.s4 1934713408
        %v2740 = vunpack.c.0.s8 %v2739
        %v2741 = vperm.slane %v2735, %v2740
        %v2743 = vunpack.c.l.s4 1934713408
        %v2744 = vunpack.c.0.s8 %v2743
        %v2745 = vperm.slane %v2737, %v2744
        %v2746 = vrot.slane %v2717, 4
        %v2747 = vsel %vm240, %v2746, %v2705
        %v2748 = vrot.slane %v2705, 4
        %v2749 = vsel %vm240, %v2717, %v2748
        %v2751 = vunpack.c.l.s4 1934713408
        %v2752 = vunpack.c.0.s8 %v2751
        %v2753 = vperm.slane %v2747, %v2752
        %v2755 = vunpack.c.l.s4 1934713408
        %v2756 = vunpack.c.0.s8 %v2755
        %v2757 = vperm.slane %v2749, %v2756
        %v2758 = vrot.slane %v2721, 4
        %v2759 = vsel %vm240, %v2758, %v2709
        %v2760 = vrot.slane %v2709, 4
        %v2761 = vsel %vm240, %v2721, %v2760
        %v2763 = vunpack.c.l.s4 1934713408
        %v2764 = vunpack.c.0.s8 %v2763
        %v2765 = vperm.slane %v2759, %v2764
        %v2767 = vunpack.c.l.s4 1934713408
        %v2768 = vunpack.c.0.s8 %v2767
        %v2769 = vperm.slane %v2761, %v2768
        %v2770 = vrot.slane %v2753, 4
        %v2771 = vsel %vm240, %v2770, %v2729
        %v2772 = vrot.slane %v2729, 4
        %v2773 = vsel %vm240, %v2753, %v2772
        %v2774 = vrot.slane %v2757, 4
        %v2775 = vsel %vm240, %v2774, %v2733
        %v2776 = vrot.slane %v2733, 4
        %v2777 = vsel %vm240, %v2757, %v2776
        %v2778 = vrot.slane %v2765, 4
        %v2779 = vsel %vm240, %v2778, %v2741
        %v2780 = vrot.slane %v2741, 4
        %v2781 = vsel %vm240, %v2765, %v2780
        %v2782 = vrot.slane %v2769, 4
        %v2783 = vsel %vm240, %v2782, %v2745
        %v2784 = vrot.slane %v2745, 4
        %v2785 = vsel %vm240, %v2769, %v2784
        %v2786 = vrot.slane %v2613, 4
        %v2787 = vsel %vm240, %v2786, %v2589
        %v2788 = vrot.slane %v2589, 4
        %v2789 = vsel %vm240, %v2613, %v2788
        %v2791 = vunpack.c.l.s4 1983009808
        %v2792 = vunpack.c.0.s8 %v2791
        %v2793 = vperm.slane %v2787, %v2792
        %v2795 = vunpack.c.l.s4 1983009808
        %v2796 = vunpack.c.0.s8 %v2795
        %v2797 = vperm.slane %v2789, %v2796
        %v2798 = vrot.slane %v2625, 4
        %v2799 = vsel %vm240, %v2798, %v2601
        %v2800 = vrot.slane %v2601, 4
        %v2801 = vsel %vm240, %v2625, %v2800
        %v2803 = vunpack.c.l.s4 1983009808
        %v2804 = vunpack.c.0.s8 %v2803
        %v2805 = vperm.slane %v2799, %v2804
        %v2807 = vunpack.c.l.s4 1983009808
        %v2808 = vunpack.c.0.s8 %v2807
        %v2809 = vperm.slane %v2801, %v2808
        %v2810 = vrot.slane %v2661, 4
        %v2811 = vsel %vm240, %v2810, %v2637
        %v2812 = vrot.slane %v2637, 4
        %v2813 = vsel %vm240, %v2661, %v2812
        %v2815 = vunpack.c.l.s4 1983009808
        %v2816 = vunpack.c.0.s8 %v2815
        %v2817 = vperm.slane %v2811, %v2816
        %v2819 = vunpack.c.l.s4 1983009808
        %v2820 = vunpack.c.0.s8 %v2819
        %v2821 = vperm.slane %v2813, %v2820
        %v2822 = vrot.slane %v2673, 4
        %v2823 = vsel %vm240, %v2822, %v2649
        %v2824 = vrot.slane %v2649, 4
        %v2825 = vsel %vm240, %v2673, %v2824
        %v2827 = vunpack.c.l.s4 1983009808
        %v2828 = vunpack.c.0.s8 %v2827
        %v2829 = vperm.slane %v2823, %v2828
        %v2831 = vunpack.c.l.s4 1983009808
        %v2832 = vunpack.c.0.s8 %v2831
        %v2833 = vperm.slane %v2825, %v2832
        %v2834 = vrot.slane %v2805, 4
        %v2835 = vsel %vm240, %v2834, %v2793
        %v2836 = vrot.slane %v2793, 4
        %v2837 = vsel %vm240, %v2805, %v2836
        %v2839 = vunpack.c.l.s4 1934713408
        %v2840 = vunpack.c.0.s8 %v2839
        %v2841 = vperm.slane %v2835, %v2840
        %v2843 = vunpack.c.l.s4 1934713408
        %v2844 = vunpack.c.0.s8 %v2843
        %v2845 = vperm.slane %v2837, %v2844
        %v2846 = vrot.slane %v2809, 4
        %v2847 = vsel %vm240, %v2846, %v2797
        %v2848 = vrot.slane %v2797, 4
        %v2849 = vsel %vm240, %v2809, %v2848
        %v2851 = vunpack.c.l.s4 1934713408
        %v2852 = vunpack.c.0.s8 %v2851
        %v2853 = vperm.slane %v2847, %v2852
        %v2855 = vunpack.c.l.s4 1934713408
        %v2856 = vunpack.c.0.s8 %v2855
        %v2857 = vperm.slane %v2849, %v2856
        %v2858 = vrot.slane %v2829, 4
        %v2859 = vsel %vm240, %v2858, %v2817
        %v2860 = vrot.slane %v2817, 4
        %v2861 = vsel %vm240, %v2829, %v2860
        %v2863 = vunpack.c.l.s4 1934713408
        %v2864 = vunpack.c.0.s8 %v2863
        %v2865 = vperm.slane %v2859, %v2864
        %v2867 = vunpack.c.l.s4 1934713408
        %v2868 = vunpack.c.0.s8 %v2867
        %v2869 = vperm.slane %v2861, %v2868
        %v2870 = vrot.slane %v2833, 4
        %v2871 = vsel %vm240, %v2870, %v2821
        %v2872 = vrot.slane %v2821, 4
        %v2873 = vsel %vm240, %v2833, %v2872
        %v2875 = vunpack.c.l.s4 1934713408
        %v2876 = vunpack.c.0.s8 %v2875
        %v2877 = vperm.slane %v2871, %v2876
        %v2879 = vunpack.c.l.s4 1934713408
        %v2880 = vunpack.c.0.s8 %v2879
        %v2881 = vperm.slane %v2873, %v2880
        %v2882 = vrot.slane %v2865, 4
        %v2883 = vsel %vm240, %v2882, %v2841
        %v2884 = vrot.slane %v2841, 4
        %v2885 = vsel %vm240, %v2865, %v2884
        %v2886 = vrot.slane %v2869, 4
        %v2887 = vsel %vm240, %v2886, %v2845
        %v2888 = vrot.slane %v2845, 4
        %v2889 = vsel %vm240, %v2869, %v2888
        %v2890 = vrot.slane %v2877, 4
        %v2891 = vsel %vm240, %v2890, %v2853
        %v2892 = vrot.slane %v2853, 4
        %v2893 = vsel %vm240, %v2877, %v2892
        %v2894 = vrot.slane %v2881, 4
        %v2895 = vsel %vm240, %v2894, %v2857
        %v2896 = vrot.slane %v2857, 4
        %v2897 = vsel %vm240, %v2881, %v2896
        %2899 = vrot.lane.b32.xlu0 %v2773, 2
        %v2900 = vpop.permute.xlu0 %2899
        %2903 = vrot.lane.b32.xlu0 %v2775, 4
        %v2904 = vpop.permute.xlu0 %2903
        %2907 = vrot.lane.b32.xlu0 %v2777, 6
        %v2908 = vpop.permute.xlu0 %2907
        %2911 = vrot.lane.b32.xlu0 %v2779, 8
        %v2912 = vpop.permute.xlu0 %2911
        %2915 = vrot.lane.b32.xlu0 %v2781, 10
        %v2916 = vpop.permute.xlu0 %2915
        %2919 = vrot.lane.b32.xlu0 %v2783, 12
        %v2920 = vpop.permute.xlu0 %2919
        %2923 = vrot.lane.b32.xlu0 %v2785, 14
        %v2924 = vpop.permute.xlu0 %2923
        %2927 = vrot.lane.b32.xlu0 %v2883, 16
        %v2928 = vpop.permute.xlu0 %2927
        %2931 = vrot.lane.b32.xlu0 %v2885, 18
        %v2932 = vpop.permute.xlu0 %2931
        %2935 = vrot.lane.b32.xlu0 %v2887, 20
        %v2936 = vpop.permute.xlu0 %2935
        %2939 = vrot.lane.b32.xlu0 %v2889, 22
        %v2940 = vpop.permute.xlu0 %2939
        %2943 = vrot.lane.b32.xlu0 %v2891, 24
        %v2944 = vpop.permute.xlu0 %2943
        %2947 = vrot.lane.b32.xlu0 %v2893, 26
        %v2948 = vpop.permute.xlu0 %2947
        %2951 = vrot.lane.b32.xlu0 %v2895, 28
        %v2952 = vpop.permute.xlu0 %2951
        %2955 = vrot.lane.b32.xlu0 %v2897, 30
        %v2956 = vpop.permute.xlu0 %2955
        %v2958 = vsel %vm524, %v2771, %v2900
        %v2959 = vsel %vm526, %v2958, %v2904
        %v2960 = vsel %vm528, %v2959, %v2908
        %v2961 = vsel %vm530, %v2960, %v2912
        %v2962 = vsel %vm532, %v2961, %v2916
        %v2963 = vsel %vm534, %v2962, %v2920
        %v2964 = vsel %vm536, %v2963, %v2924
        %v2965 = vsel %vm538, %v2964, %v2928
        %v2966 = vsel %vm540, %v2965, %v2932
        %v2967 = vsel %vm542, %v2966, %v2936
        %v2968 = vsel %vm544, %v2967, %v2940
        %v2969 = vsel %vm546, %v2968, %v2944
        %v2970 = vsel %vm548, %v2969, %v2948
        %v2971 = vsel %vm550, %v2970, %v2952
        %v2972 = vsel %vm552, %v2971, %v2956
        %2973 = vst.msk [vmem:[%s133 + $0x18] sm:$0xff] %vm554, %v2972
        %2975 = vrot.lane.b32.xlu0 %v2972, 32
        %v2976 = vpop.permute.xlu0 %2975
        %2978 = vst.msk [vmem:[%s133 + $0x18] sm:$0xff] %vm560, %v2976
        %v2979 = vlaneseq
        %v2980 = vshrl.u32 %v2979, 7
        %v2981 = vadd.s32 %v2980, 112
        %2982 = vset.pattern.permute.xlu0 %v2981
        %2983 = vperm.xlu0 %2982, %v135
        %v2984 = vpop.permute.xlu0 %2983
        %v2985 = vlaneseq
        %v2986 = vshrl.u32 %v2985, 7
        %v2987 = vadd.s32 %v2986, 120
        %2988 = vset.pattern.permute.xlu0 %v2987
        %2989 = vperm.xlu0 %2988, %v135
        %v2990 = vpop.permute.xlu0 %2989
        %v2991 = vlaneseq
        %v2992 = vshrl.u32 %v2991, 7
        %v2993 = vadd.s32 %v2992, 112
        %2994 = vset.pattern.permute.xlu0 %v2993
        %2995 = vperm.xlu0 %2994, %v148
        %v2996 = vpop.permute.xlu0 %2995
        %v2997 = vlaneseq
        %v2998 = vshrl.u32 %v2997, 7
        %v2999 = vadd.s32 %v2998, 120
        %3000 = vset.pattern.permute.xlu0 %v2999
        %3001 = vperm.xlu0 %3000, %v148
        %v3002 = vpop.permute.xlu0 %3001
        %v3003 = vlaneseq
        %v3004 = vshrl.u32 %v3003, 7
        %v3005 = vadd.s32 %v3004, 112
        %3006 = vset.pattern.permute.xlu0 %v3005
        %3007 = vperm.xlu0 %3006, %v161
        %v3008 = vpop.permute.xlu0 %3007
        %v3009 = vlaneseq
        %v3010 = vshrl.u32 %v3009, 7
        %v3011 = vadd.s32 %v3010, 120
        %3012 = vset.pattern.permute.xlu0 %v3011
        %3013 = vperm.xlu0 %3012, %v161
        %v3014 = vpop.permute.xlu0 %3013
        %v3015 = vlaneseq
        %v3016 = vshrl.u32 %v3015, 7
        %v3017 = vadd.s32 %v3016, 112
        %3018 = vset.pattern.permute.xlu0 %v3017
        %3019 = vperm.xlu0 %3018, %v174
        %v3020 = vpop.permute.xlu0 %3019
        %v3021 = vlaneseq
        %v3022 = vshrl.u32 %v3021, 7
        %v3023 = vadd.s32 %v3022, 120
        %3024 = vset.pattern.permute.xlu0 %v3023
        %3025 = vperm.xlu0 %3024, %v174
        %v3026 = vpop.permute.xlu0 %3025
        %v3027 = vlaneseq
        %v3028 = vshrl.u32 %v3027, 7
        %v3029 = vadd.s32 %v3028, 112
        %3030 = vset.pattern.permute.xlu0 %v3029
        %3031 = vperm.xlu0 %3030, %v187
        %v3032 = vpop.permute.xlu0 %3031
        %v3033 = vlaneseq
        %v3034 = vshrl.u32 %v3033, 7
        %v3035 = vadd.s32 %v3034, 120
        %3036 = vset.pattern.permute.xlu0 %v3035
        %3037 = vperm.xlu0 %3036, %v187
        %v3038 = vpop.permute.xlu0 %3037
        %v3039 = vlaneseq
        %v3040 = vshrl.u32 %v3039, 7
        %v3041 = vadd.s32 %v3040, 112
        %3042 = vset.pattern.permute.xlu0 %v3041
        %3043 = vperm.xlu0 %3042, %v200
        %v3044 = vpop.permute.xlu0 %3043
        %v3045 = vlaneseq
        %v3046 = vshrl.u32 %v3045, 7
        %v3047 = vadd.s32 %v3046, 120
        %3048 = vset.pattern.permute.xlu0 %v3047
        %3049 = vperm.xlu0 %3048, %v200
        %v3050 = vpop.permute.xlu0 %3049
        %v3051 = vlaneseq
        %v3052 = vshrl.u32 %v3051, 7
        %v3053 = vadd.s32 %v3052, 112
        %3054 = vset.pattern.permute.xlu0 %v3053
        %3055 = vperm.xlu0 %3054, %v213
        %v3056 = vpop.permute.xlu0 %3055
        %v3057 = vlaneseq
        %v3058 = vshrl.u32 %v3057, 7
        %v3059 = vadd.s32 %v3058, 120
        %3060 = vset.pattern.permute.xlu0 %v3059
        %3061 = vperm.xlu0 %3060, %v213
        %v3062 = vpop.permute.xlu0 %3061
        %v3063 = vlaneseq
        %v3064 = vshrl.u32 %v3063, 7
        %v3065 = vadd.s32 %v3064, 112
        %3066 = vset.pattern.permute.xlu0 %v3065
        %3067 = vperm.xlu0 %3066, %v226
        %v3068 = vpop.permute.xlu0 %3067
        %v3069 = vlaneseq
        %v3070 = vshrl.u32 %v3069, 7
        %v3071 = vadd.s32 %v3070, 120
        %3072 = vset.pattern.permute.xlu0 %v3071
        %3073 = vperm.xlu0 %3072, %v226
        %v3074 = vpop.permute.xlu0 %3073
        %v3075 = vrot.slane %v3008, 4
        %v3076 = vsel %vm240, %v3075, %v2984
        %v3077 = vrot.slane %v2984, 4
        %v3078 = vsel %vm240, %v3008, %v3077
        %v3080 = vunpack.c.l.s4 1983009808
        %v3081 = vunpack.c.0.s8 %v3080
        %v3082 = vperm.slane %v3076, %v3081
        %v3084 = vunpack.c.l.s4 1983009808
        %v3085 = vunpack.c.0.s8 %v3084
        %v3086 = vperm.slane %v3078, %v3085
        %v3087 = vrot.slane %v3020, 4
        %v3088 = vsel %vm240, %v3087, %v2996
        %v3089 = vrot.slane %v2996, 4
        %v3090 = vsel %vm240, %v3020, %v3089
        %v3092 = vunpack.c.l.s4 1983009808
        %v3093 = vunpack.c.0.s8 %v3092
        %v3094 = vperm.slane %v3088, %v3093
        %v3096 = vunpack.c.l.s4 1983009808
        %v3097 = vunpack.c.0.s8 %v3096
        %v3098 = vperm.slane %v3090, %v3097
        %v3099 = vrot.slane %v3056, 4
        %v3100 = vsel %vm240, %v3099, %v3032
        %v3101 = vrot.slane %v3032, 4
        %v3102 = vsel %vm240, %v3056, %v3101
        %v3104 = vunpack.c.l.s4 1983009808
        %v3105 = vunpack.c.0.s8 %v3104
        %v3106 = vperm.slane %v3100, %v3105
        %v3108 = vunpack.c.l.s4 1983009808
        %v3109 = vunpack.c.0.s8 %v3108
        %v3110 = vperm.slane %v3102, %v3109
        %v3111 = vrot.slane %v3068, 4
        %v3112 = vsel %vm240, %v3111, %v3044
        %v3113 = vrot.slane %v3044, 4
        %v3114 = vsel %vm240, %v3068, %v3113
        %v3116 = vunpack.c.l.s4 1983009808
        %v3117 = vunpack.c.0.s8 %v3116
        %v3118 = vperm.slane %v3112, %v3117
        %v3120 = vunpack.c.l.s4 1983009808
        %v3121 = vunpack.c.0.s8 %v3120
        %v3122 = vperm.slane %v3114, %v3121
        %v3123 = vrot.slane %v3094, 4
        %v3124 = vsel %vm240, %v3123, %v3082
        %v3125 = vrot.slane %v3082, 4
        %v3126 = vsel %vm240, %v3094, %v3125
        %v3128 = vunpack.c.l.s4 1934713408
        %v3129 = vunpack.c.0.s8 %v3128
        %v3130 = vperm.slane %v3124, %v3129
        %v3132 = vunpack.c.l.s4 1934713408
        %v3133 = vunpack.c.0.s8 %v3132
        %v3134 = vperm.slane %v3126, %v3133
        %v3135 = vrot.slane %v3098, 4
        %v3136 = vsel %vm240, %v3135, %v3086
        %v3137 = vrot.slane %v3086, 4
        %v3138 = vsel %vm240, %v3098, %v3137
        %v3140 = vunpack.c.l.s4 1934713408
        %v3141 = vunpack.c.0.s8 %v3140
        %v3142 = vperm.slane %v3136, %v3141
        %v3144 = vunpack.c.l.s4 1934713408
        %v3145 = vunpack.c.0.s8 %v3144
        %v3146 = vperm.slane %v3138, %v3145
        %v3147 = vrot.slane %v3118, 4
        %v3148 = vsel %vm240, %v3147, %v3106
        %v3149 = vrot.slane %v3106, 4
        %v3150 = vsel %vm240, %v3118, %v3149
        %v3152 = vunpack.c.l.s4 1934713408
        %v3153 = vunpack.c.0.s8 %v3152
        %v3154 = vperm.slane %v3148, %v3153
        %v3156 = vunpack.c.l.s4 1934713408
        %v3157 = vunpack.c.0.s8 %v3156
        %v3158 = vperm.slane %v3150, %v3157
        %v3159 = vrot.slane %v3122, 4
        %v3160 = vsel %vm240, %v3159, %v3110
        %v3161 = vrot.slane %v3110, 4
        %v3162 = vsel %vm240, %v3122, %v3161
        %v3164 = vunpack.c.l.s4 1934713408
        %v3165 = vunpack.c.0.s8 %v3164
        %v3166 = vperm.slane %v3160, %v3165
        %v3168 = vunpack.c.l.s4 1934713408
        %v3169 = vunpack.c.0.s8 %v3168
        %v3170 = vperm.slane %v3162, %v3169
        %v3171 = vrot.slane %v3154, 4
        %v3172 = vsel %vm240, %v3171, %v3130
        %v3173 = vrot.slane %v3130, 4
        %v3174 = vsel %vm240, %v3154, %v3173
        %v3175 = vrot.slane %v3158, 4
        %v3176 = vsel %vm240, %v3175, %v3134
        %v3177 = vrot.slane %v3134, 4
        %v3178 = vsel %vm240, %v3158, %v3177
        %v3179 = vrot.slane %v3166, 4
        %v3180 = vsel %vm240, %v3179, %v3142
        %v3181 = vrot.slane %v3142, 4
        %v3182 = vsel %vm240, %v3166, %v3181
        %v3183 = vrot.slane %v3170, 4
        %v3184 = vsel %vm240, %v3183, %v3146
        %v3185 = vrot.slane %v3146, 4
        %v3186 = vsel %vm240, %v3170, %v3185
        %v3187 = vrot.slane %v3014, 4
        %v3188 = vsel %vm240, %v3187, %v2990
        %v3189 = vrot.slane %v2990, 4
        %v3190 = vsel %vm240, %v3014, %v3189
        %v3192 = vunpack.c.l.s4 1983009808
        %v3193 = vunpack.c.0.s8 %v3192
        %v3194 = vperm.slane %v3188, %v3193
        %v3196 = vunpack.c.l.s4 1983009808
        %v3197 = vunpack.c.0.s8 %v3196
        %v3198 = vperm.slane %v3190, %v3197
        %v3199 = vrot.slane %v3026, 4
        %v3200 = vsel %vm240, %v3199, %v3002
        %v3201 = vrot.slane %v3002, 4
        %v3202 = vsel %vm240, %v3026, %v3201
        %v3204 = vunpack.c.l.s4 1983009808
        %v3205 = vunpack.c.0.s8 %v3204
        %v3206 = vperm.slane %v3200, %v3205
        %v3208 = vunpack.c.l.s4 1983009808
        %v3209 = vunpack.c.0.s8 %v3208
        %v3210 = vperm.slane %v3202, %v3209
        %v3211 = vrot.slane %v3062, 4
        %v3212 = vsel %vm240, %v3211, %v3038
        %v3213 = vrot.slane %v3038, 4
        %v3214 = vsel %vm240, %v3062, %v3213
        %v3216 = vunpack.c.l.s4 1983009808
        %v3217 = vunpack.c.0.s8 %v3216
        %v3218 = vperm.slane %v3212, %v3217
        %v3220 = vunpack.c.l.s4 1983009808
        %v3221 = vunpack.c.0.s8 %v3220
        %v3222 = vperm.slane %v3214, %v3221
        %v3223 = vrot.slane %v3074, 4
        %v3224 = vsel %vm240, %v3223, %v3050
        %v3225 = vrot.slane %v3050, 4
        %v3226 = vsel %vm240, %v3074, %v3225
        %v3228 = vunpack.c.l.s4 1983009808
        %v3229 = vunpack.c.0.s8 %v3228
        %v3230 = vperm.slane %v3224, %v3229
        %v3232 = vunpack.c.l.s4 1983009808
        %v3233 = vunpack.c.0.s8 %v3232
        %v3234 = vperm.slane %v3226, %v3233
        %v3235 = vrot.slane %v3206, 4
        %v3236 = vsel %vm240, %v3235, %v3194
        %v3237 = vrot.slane %v3194, 4
        %v3238 = vsel %vm240, %v3206, %v3237
        %v3240 = vunpack.c.l.s4 1934713408
        %v3241 = vunpack.c.0.s8 %v3240
        %v3242 = vperm.slane %v3236, %v3241
        %v3244 = vunpack.c.l.s4 1934713408
        %v3245 = vunpack.c.0.s8 %v3244
        %v3246 = vperm.slane %v3238, %v3245
        %v3247 = vrot.slane %v3210, 4
        %v3248 = vsel %vm240, %v3247, %v3198
        %v3249 = vrot.slane %v3198, 4
        %v3250 = vsel %vm240, %v3210, %v3249
        %v3252 = vunpack.c.l.s4 1934713408
        %v3253 = vunpack.c.0.s8 %v3252
        %v3254 = vperm.slane %v3248, %v3253
        %v3256 = vunpack.c.l.s4 1934713408
        %v3257 = vunpack.c.0.s8 %v3256
        %v3258 = vperm.slane %v3250, %v3257
        %v3259 = vrot.slane %v3230, 4
        %v3260 = vsel %vm240, %v3259, %v3218
        %v3261 = vrot.slane %v3218, 4
        %v3262 = vsel %vm240, %v3230, %v3261
        %v3264 = vunpack.c.l.s4 1934713408
        %v3265 = vunpack.c.0.s8 %v3264
        %v3266 = vperm.slane %v3260, %v3265
        %v3268 = vunpack.c.l.s4 1934713408
        %v3269 = vunpack.c.0.s8 %v3268
        %v3270 = vperm.slane %v3262, %v3269
        %v3271 = vrot.slane %v3234, 4
        %v3272 = vsel %vm240, %v3271, %v3222
        %v3273 = vrot.slane %v3222, 4
        %v3274 = vsel %vm240, %v3234, %v3273
        %v3276 = vunpack.c.l.s4 1934713408
        %v3277 = vunpack.c.0.s8 %v3276
        %v3278 = vperm.slane %v3272, %v3277
        %v3280 = vunpack.c.l.s4 1934713408
        %v3281 = vunpack.c.0.s8 %v3280
        %v3282 = vperm.slane %v3274, %v3281
        %v3283 = vrot.slane %v3266, 4
        %v3284 = vsel %vm240, %v3283, %v3242
        %v3285 = vrot.slane %v3242, 4
        %v3286 = vsel %vm240, %v3266, %v3285
        %v3287 = vrot.slane %v3270, 4
        %v3288 = vsel %vm240, %v3287, %v3246
        %v3289 = vrot.slane %v3246, 4
        %v3290 = vsel %vm240, %v3270, %v3289
        %v3291 = vrot.slane %v3278, 4
        %v3292 = vsel %vm240, %v3291, %v3254
        %v3293 = vrot.slane %v3254, 4
        %v3294 = vsel %vm240, %v3278, %v3293
        %v3295 = vrot.slane %v3282, 4
        %v3296 = vsel %vm240, %v3295, %v3258
        %v3297 = vrot.slane %v3258, 4
        %v3298 = vsel %vm240, %v3282, %v3297
        %3300 = vrot.lane.b32.xlu0 %v3174, 2
        %v3301 = vpop.permute.xlu0 %3300
        %3304 = vrot.lane.b32.xlu0 %v3176, 4
        %v3305 = vpop.permute.xlu0 %3304
        %3308 = vrot.lane.b32.xlu0 %v3178, 6
        %v3309 = vpop.permute.xlu0 %3308
        %3312 = vrot.lane.b32.xlu0 %v3180, 8
        %v3313 = vpop.permute.xlu0 %3312
        %3316 = vrot.lane.b32.xlu0 %v3182, 10
        %v3317 = vpop.permute.xlu0 %3316
        %3320 = vrot.lane.b32.xlu0 %v3184, 12
        %v3321 = vpop.permute.xlu0 %3320
        %3324 = vrot.lane.b32.xlu0 %v3186, 14
        %v3325 = vpop.permute.xlu0 %3324
        %3328 = vrot.lane.b32.xlu0 %v3284, 16
        %v3329 = vpop.permute.xlu0 %3328
        %3332 = vrot.lane.b32.xlu0 %v3286, 18
        %v3333 = vpop.permute.xlu0 %3332
        %3336 = vrot.lane.b32.xlu0 %v3288, 20
        %v3337 = vpop.permute.xlu0 %3336
        %3340 = vrot.lane.b32.xlu0 %v3290, 22
        %v3341 = vpop.permute.xlu0 %3340
        %3344 = vrot.lane.b32.xlu0 %v3292, 24
        %v3345 = vpop.permute.xlu0 %3344
        %3348 = vrot.lane.b32.xlu0 %v3294, 26
        %v3349 = vpop.permute.xlu0 %3348
        %3352 = vrot.lane.b32.xlu0 %v3296, 28
        %v3353 = vpop.permute.xlu0 %3352
        %3356 = vrot.lane.b32.xlu0 %v3298, 30
        %v3357 = vpop.permute.xlu0 %3356
        %v3359 = vsel %vm524, %v3172, %v3301
        %v3360 = vsel %vm526, %v3359, %v3305
        %v3361 = vsel %vm528, %v3360, %v3309
        %v3362 = vsel %vm530, %v3361, %v3313
        %v3363 = vsel %vm532, %v3362, %v3317
        %v3364 = vsel %vm534, %v3363, %v3321
        %v3365 = vsel %vm536, %v3364, %v3325
        %v3366 = vsel %vm538, %v3365, %v3329
        %v3367 = vsel %vm540, %v3366, %v3333
        %v3368 = vsel %vm542, %v3367, %v3337
        %v3369 = vsel %vm544, %v3368, %v3341
        %v3370 = vsel %vm546, %v3369, %v3345
        %v3371 = vsel %vm548, %v3370, %v3349
        %v3372 = vsel %vm550, %v3371, %v3353
        %v3373 = vsel %vm552, %v3372, %v3357
        %3375 = vrot.lane.b32.xlu0 %v3373, 64
        %v3376 = vpop.permute.xlu0 %3375
        %3378 = vst.msk [vmem:[%s133 + $0x18] sm:$0xff] %vm961, %v3376
        %3379 = vrot.lane.b32.xlu0 %v3373, 96
        %v3380 = vpop.permute.xlu0 %3379
        %3382 = vst.msk [vmem:[%s133 + $0x18] sm:$0xff] %vm966, %v3380
        %s3383 = sand.u32 %s52, 1
        %s3384 = scalar_lea.sflag [#allocation4], %s3383
        %s3385 = sand.u32 %s52, 1
        %s3386 = smul.addr %s3385, 32
        %s3387 = scalar_lea.vmem [#allocation5], %s3386
        // Predicated region
        $region29: #{tpu_custom_call.1} parent=23 // pred_check
          %p3388 = pneg %p62
        $region30: #{tpu_custom_call.1} parent=23 // pred_check_branch
          %3390 = sbr.rel (%p3388) target = $region32
        $region31: #{tpu_custom_call.1} parent=23 // pred_region
          %3392 = vsyncadd %s3384, 0
          %s3393 = smul.addr %s18, 4
          %s3394 = smul.addr %s3393, 8
          %s3395 = scalar_lea.hbm %s1, %s3394
          %s3397 = sshll.u32 %s3387, 4
          %s3398 = int_to_ptr.vmem [resolvable:$true] %s3397
          %s3399 = sshll.u32 %s3395, 4
          %s3400 = int_to_ptr.hbm [resolvable:$true] %s3399
          %3402 = dma.vmem_to_hbm [thread:$0]  %s3398, 512, %s3400, %s3384
        $region32: #{tpu_custom_call.1} parent=23 // pred_fallthru
          _
      $region24: #{tpu_custom_call.1} parent=5 // pred_fallthru
        _
      %p3403 = scmp.le.s32.totalorder 2, %s13
      // Predicated region
      $region33: #{tpu_custom_call.1} parent=5 // pred_check
        %p3404 = pneg %p3403
      $region34: #{tpu_custom_call.1} parent=5 // pred_check_branch
        %3406 = sbr.rel (%p3404) target = $region36
      $region35: #{tpu_custom_call.1} parent=5 // pred_region
        %s3407 = ssub.s32 %s13, 2
        // Predicated region
        $region37: #{tpu_custom_call.1} parent=35 // pred_check
          %p3408 = pneg %p68
        $region38: #{tpu_custom_call.1} parent=35 // pred_check_branch
          %3410 = sbr.rel (%p3408) target = $region40
        $region39: #{tpu_custom_call.1} parent=35 // pred_region
          %s3411 = sand.u32 %s53, 1
          %s3412 = scalar_lea.sflag [#allocation4], %s3411
          %s3413 = sand.u32 %s53, 1
          %s3414 = smul.addr %s3413, 32
          %s3415 = scalar_lea.vmem [#allocation5], %s3414
          %3417 = dma.done %s3412, 512
        $region40: #{tpu_custom_call.1} parent=35 // pred_fallthru
          _
      $region36: #{tpu_custom_call.1} parent=5 // pred_fallthru
        _
    $region6: #{tpu_custom_call.1} parent=1 // loop_footer
      %s17 = sadd.s32 1, %s13
    $region7: #{tpu_custom_call.1} parent=1 // loop_footer_branch
      %12 = sbr.rel target = $region3
    $region8: #{tpu_custom_call.1} parent=1 // loop_exit
      _
    %3418 = vsyncpa [#allocation3], 1
    %s3419 = scalar_lea.sflag [#allocation3], 1
    %3420 = vsyncpa %s3419, 1
    %3421 = vsyncpa [#allocation4], 1
    %s3422 = scalar_lea.sflag [#allocation4], 1
    %3423 = vsyncpa %s3422, 1

</llo_original>
